<compile_context>
chip_gen: v7x
topology: tpu7x:2x2x1
jax: 0.10.0
libtpu: 0.0.40
codegen_flags: <defaults>
</compile_context>

<pallas_src>
import jax
import jax.numpy as jnp
from jax.experimental import pallas as pl
from jax.experimental.pallas import tpu as pltpu

NEG_SLOPE = 0.01  # torch F.leaky_relu default negative_slope
_VMEM_LIMIT = 40 * 1024 * 1024  # > v5e 16 MiB default scoped, < v7x 64 MiB physical


def _leaky_relu(x):
    return jnp.where(x > 0, x, NEG_SLOPE * x)


# ---------------------------------------------------------------------------
# Wide layers (fc1, fc2): y = leaky_relu(x @ W + b), tiled over N only.
# ---------------------------------------------------------------------------
def _linear_leaky_kernel(x_ref, w_ref, b_ref, o_ref):
    y = jnp.dot(x_ref[...], w_ref[...], preferred_element_type=jnp.float32)
    y = y + b_ref[...]
    o_ref[...] = _leaky_relu(y).astype(o_ref.dtype)


def _pick_tn(K, N):
    """Largest lane-aligned divisor of N giving a W block <= ~8 MiB and at
    least 2 (preferably 4) N tiles, so both v7x TensorCores get work and the
    double-buffered W stream fits every generation's scoped VMEM."""
    if N <= 256:
        return N
    candidates = [t for t in range(128, N, 128) if N % t == 0]
    max_block_bytes = 8 * 1024 * 1024
    for min_blocks in (4, 2):
        fits = [t for t in candidates
                if N // t >= min_blocks and K * t * 4 <= max_block_bytes]
        if fits:
            return max(fits)
    return min(candidates) if candidates else N


def linear_leaky_pallas(x, w, b):
    """leaky_relu(x @ w + b) with x:(M,K), w:(K,N), b:(N,). No padding, no K axis."""
    M, K = x.shape
    Kw, N = w.shape
    assert K == Kw
    tn = _pick_tn(K, N)
    assert N % tn == 0
    b2d = b.reshape(1, N)

    return pl.pallas_call(
        _linear_leaky_kernel,
        out_shape=jax.ShapeDtypeStruct((M, N), jnp.float32),
        grid_spec=pltpu.PrefetchScalarGridSpec(
            num_scalar_prefetch=0,
            grid=(N // tn,),
            in_specs=[
                pl.BlockSpec((M, K), lambda j: (0, 0)),   # full activation rows (<=160 KB)
                pl.BlockSpec((K, tn), lambda j: (0, j)),  # streaming multi-MB W column block
                pl.BlockSpec((1, tn), lambda j: (0, j)),  # bias slice
            ],
            out_specs=pl.BlockSpec((M, tn), lambda j: (0, j)),
        ),
        compiler_params=pltpu.CompilerParams(
            dimension_semantics=("parallel",),
            vmem_limit_bytes=_VMEM_LIMIT,
        ),
    )(x, w, b2d)


# ---------------------------------------------------------------------------
# Fused tail: fc3 -> leaky_relu -> fc4 -> leaky_relu -> fc5 -> softmax.
# All three weight matrices (< 0.5 MB) plus the (M, 1024) activation fit VMEM,
# so this is a single no-grid pallas_call with whole-array blocks.
# ---------------------------------------------------------------------------
def _tail_kernel(x_ref, w3_ref, b3_ref, w4_ref, b4_ref, w5_ref, b5_ref, o_ref):
    h = jnp.dot(x_ref[...], w3_ref[...], preferred_element_type=jnp.float32)
    h = _leaky_relu(h + b3_ref[...])
    h = jnp.dot(h, w4_ref[...], preferred_element_type=jnp.float32)
    h = _leaky_relu(h + b4_ref[...])
    z = jnp.dot(h, w5_ref[...], preferred_element_type=jnp.float32)
    z = z + b5_ref[...]
    # softmax over the whole row (entire row lives in this single block)
    z = z - jnp.max(z, axis=-1, keepdims=True)
    e = jnp.exp(z)
    o_ref[...] = (e / jnp.sum(e, axis=-1, keepdims=True)).astype(o_ref.dtype)


def tail_pallas(x, w3, b3, w4, b4, w5, b5):
    M = x.shape[0]
    N = w5.shape[1]
    return pl.pallas_call(
        _tail_kernel,
        out_shape=jax.ShapeDtypeStruct((M, N), jnp.float32),
    )(x, w3, b3.reshape(1, -1), w4, b4.reshape(1, -1), w5, b5.reshape(1, -1))


# ---------------------------------------------------------------------------
# Model
# ---------------------------------------------------------------------------
def init_dnn_params(key, input_size, output_size):
    """Deterministic params matching nn.Linear shapes (U(-1/sqrt(fan_in), ...))."""
    sizes = [input_size, 5120, 1024, 64, 512, output_size]
    params = []
    for i in range(5):
        key, kw, kb = jax.random.split(key, 3)
        fan_in = sizes[i]
        bound = 1.0 / (fan_in ** 0.5)
        W = jax.random.uniform(
            kw, (sizes[i], sizes[i + 1]), jnp.float32, -bound, bound
        )
        bvec = jax.random.uniform(kb, (sizes[i + 1],), jnp.float32, -bound, bound)
        params.append((W, bvec))
    return params


def dnn_forward(params, x, input_size):
    x = x.reshape(-1, input_size)  # x.view(-1, input_size)
    (w1, b1), (w2, b2), (w3, b3), (w4, b4), (w5, b5) = params
    x = linear_leaky_pallas(x, w1, b1)   # fc1 + leaky_relu
    x = linear_leaky_pallas(x, w2, b2)   # fc2 + leaky_relu
    return tail_pallas(x, w3, b3, w4, b4, w5, b5)  # fc3..fc5 + softmax, fused


def dnn_reference(params, x, input_size):
    x = x.reshape(-1, input_size)
    for W, bvec in params[:-1]:
        x = x @ W + bvec
        x = jnp.where(x > 0, x, NEG_SLOPE * x)
    W, bvec = params[-1]
    return jax.nn.softmax(x @ W + bvec, axis=1)


if __name__ == "__main__":
    input_size = 28 * 28  # 784 (MNIST)
    output_size = 10
    batch = 8

    key = jax.random.PRNGKey(0)
    key_x, key_p = jax.random.split(key)
    # NCHW input like PyTorch, flattened inside forward
    x = jax.random.normal(key_x, (batch, 1, 28, 28), dtype=jnp.float32)
    params = init_dnn_params(key_p, input_size, output_size)

    y = jax.block_until_ready(dnn_forward(params, x, input_size))
    y_ref = jax.block_until_ready(dnn_reference(params, x, input_size))

    assert y.shape == (batch, output_size), y.shape
    assert jnp.allclose(jnp.sum(y, axis=1), 1.0, atol=1e-4), "softmax rows != 1"
    assert jnp.allclose(y, y_ref, atol=1e-2, rtol=1e-2), "mismatch vs reference"

    print("KERNEL_OK")
</pallas_src>

<mosaic_0001>
module attributes {stable_mosaic.version = 11 : i64} {
  func.func @_linear_leaky_kernel(%arg0: i32, %arg1: memref<8x784xf32, #tpu.memory_space<vmem>>, %arg2: memref<784x1280xf32, #tpu.memory_space<vmem>>, %arg3: memref<1x1280xf32, #tpu.memory_space<vmem>>, %arg4: memref<8x1280xf32, #tpu.memory_space<vmem>>) attributes {dimension_semantics = [#tpu.dimension_semantics<parallel>], iteration_bounds = array<i64: 4>, scalar_prefetch = 0 : i64, scratch_operands = 0 : i64, tpu.core_type = #tpu.core_type<tc>, window_params = [{pipeline_mode = #tpu.pipeline_mode<synchronous>, transform_indices = @transform_0, window_bounds = array<i64: 8, 784>}, {transform_indices = @transform_1, window_bounds = array<i64: 784, 1280>}, {transform_indices = @transform_2, window_bounds = array<i64: 1, 1280>}, {transform_indices = @transform_3, window_bounds = array<i64: 8, 1280>}]} {
    %c0 = arith.constant 0 : index
    %c0_0 = arith.constant 0 : index
    %0 = vector.load %arg1[%c0, %c0_0] : memref<8x784xf32, #tpu.memory_space<vmem>>, vector<8x784xf32>
    %c0_1 = arith.constant 0 : index
    %c0_2 = arith.constant 0 : index
    %1 = vector.load %arg2[%c0_1, %c0_2] : memref<784x1280xf32, #tpu.memory_space<vmem>>, vector<784x1280xf32>
    %cst = arith.constant dense<0.000000e+00> : vector<8x1280xf32>
    %2 = tpu.matmul %0, %1, %cst {dimension_numbers = #tpu.dot_dimension_numbers<[1], [0], [0], [1], [0, 0, 1, 1], [], []>} : vector<8x784xf32>, vector<784x1280xf32>, vector<8x1280xf32> -> vector<8x1280xf32>
    %c0_3 = arith.constant 0 : index
    %c0_4 = arith.constant 0 : index
    %3 = vector.load %arg3[%c0_3, %c0_4] : memref<1x1280xf32, #tpu.memory_space<vmem>>, vector<1x1280xf32>
    %4 = vector.broadcast %3 : vector<1x1280xf32> to vector<8x1280xf32>
    %5 = arith.addf %2, %4 : vector<8x1280xf32>
    %cst_5 = arith.constant 0.000000e+00 : f32
    %6 = vector.broadcast %cst_5 : f32 to vector<8x1280xf32>
    %7 = arith.cmpf ogt, %5, %6 : vector<8x1280xf32>
    %cst_6 = arith.constant 0.00999999977 : f32
    %8 = vector.broadcast %cst_6 : f32 to vector<8x1280xf32>
    %9 = arith.mulf %8, %5 : vector<8x1280xf32>
    %10 = arith.select %7, %5, %9 : vector<8x1280xi1>, vector<8x1280xf32>
    %c0_7 = arith.constant 0 : index
    %c0_8 = arith.constant 0 : index
    %11 = vector.load %arg4[%c0_7, %c0_8] : memref<8x1280xf32, #tpu.memory_space<vmem>>, vector<8x1280xf32>
    tpu.vector_store %arg4[%c0_7, %c0_8], %10 {strides = array<i32>} : memref<8x1280xf32, #tpu.memory_space<vmem>>, vector<8x1280xf32>,
    return
  }
  func.func @transform_0(%arg0: i32) -> (i32, i32) {
    %c0_i32 = arith.constant 0 : i32
    %c0_i32_0 = arith.constant 0 : i32
    %c0_i32_1 = arith.constant 0 : i32
    return %c0_i32, %c0_i32_0 : i32, i32
  }
  func.func @transform_1(%arg0: i32) -> (i32, i32) {
    %c0_i32 = arith.constant 0 : i32
    %c0_i32_0 = arith.constant 0 : i32
    return %c0_i32, %arg0 : i32, i32
  }
  func.func @transform_2(%arg0: i32) -> (i32, i32) {
    %c0_i32 = arith.constant 0 : i32
    %c0_i32_0 = arith.constant 0 : i32
    return %c0_i32, %arg0 : i32, i32
  }
  func.func @transform_3(%arg0: i32) -> (i32, i32) {
    %c0_i32 = arith.constant 0 : i32
    %c0_i32_0 = arith.constant 0 : i32
    return %c0_i32, %arg0 : i32, i32
  }
}

</mosaic_0001>

<llo_original>
// kernel: tpu_custom_call.1
$region0: #{tpu_custom_call.1}
  #allocation0 [shape = 'u32[]', space=smem, size = 0x4, offset = 0x4, fixed_abs, tag = 'smem constant byte address 0x4 - core index']
  #allocation1 [shape = 'u32[144,128]{1,0:T(1,128)}', space=vmem, size = 0x12000, scoped, tag = 'internal scratch']
  %s0 = inlined_call_operand.hbm [shape: f32[8,784], index: 0, kind: input, shape index: {}]
  %s1 = inlined_call_operand.hbm [shape: f32[784,5120], index: 1, kind: input, shape index: {}]
  %s2 = inlined_call_operand.hbm [shape: f32[1,5120], index: 2, kind: input, shape index: {}]
  %s3 = inlined_call_operand.hbm [shape: f32[8,5120], index: 3, kind: output, shape index: {}]
  %s4 = sld [smem:[#allocation0]]
  $region57: #{tpu_custom_call.1} parent=0
    _
  %s6 = ssub.s32 1, %s4
  %s7 = scalar_select 0, %s6, %s4
  $region1: #{tpu_custom_call.1} parent=0
    #allocation2 [shape = 'u8[28672]{0}', space=vmem, size = 0x7000, scoped, tag = 'input window, operand 0, single buffered']
    #allocation3 [shape = 's32[2]{0}', space=sflag, size = 0x8, scoped, tag = 'scoped memory for tpu_custom_call.1']
    #allocation4 [shape = 's32[2]{0}', space=sflag, size = 0x8, scoped, tag = 'scoped memory for tpu_custom_call.1']
    #allocation5 [shape = 'u8[8028160]{0}', space=vmem, size = 0x7a8000, scoped, tag = 'input window, operand 1']
    #allocation6 [shape = 's32[2]{0}', space=sflag, size = 0x8, scoped, tag = 'scoped memory for tpu_custom_call.1']
    #allocation7 [shape = 'u8[10240]{0}', space=vmem, size = 0x2800, scoped, tag = 'input window, operand 2']
    #allocation8 [shape = 'u8[81920]{0}', space=vmem, size = 0x14000, scoped, tag = 'output window, operand 0']
    %8 = vsyncpa [#allocation3], 0
    %9 = vsyncpa [#allocation6], 0
    %s10 = scalar_lea.sflag [#allocation6], 1
    %11 = vsyncpa %s10, 0
    %12 = vsyncpa [#allocation4], 0
    %s13 = scalar_lea.sflag [#allocation4], 1
    %14 = vsyncpa %s13, 0
    loop: start=0, step=1, limit=6
    $region2: #{tpu_custom_call.1} parent=1 // loop_pre_header
      _
    $region3: #{tpu_custom_call.1} parent=1 // loop_header
      %s16 = sphi 0, %s20
      %p17 = scmp.ge.s32.totalorder %s16, 6
      %s24 = sphi 0, %s24
      %s26 = sphi 0, %s24
      %s27 = sphi 0, %s26
      %s41 = sphi 0, %s27
      %s47 = sphi 0, %s49
      %s50 = sphi 0, %s47
      %s51 = sphi 0, %s50
      %s67 = sphi 0, %s51
      %s73 = sphi 0, %s75
      %s76 = sphi 0, %s73
      %s77 = sphi 0, %s76
      %s93 = sphi 0, %s77
      %s99 = sphi 0, %s101
      %s102 = sphi 0, %s99
      %s103 = sphi 0, %s102
      %s119 = sphi 0, %s103
    $region4: #{tpu_custom_call.1} parent=1 // loop_header_branch
      %19 = sbr.rel (%p17) target = $region8
    $region5: #{tpu_custom_call.1} parent=1 // loop_body
      %s21 = ssub.s32 %s16, 1
      %s22 = ssub.s32 %s16, 2
      %s23 = sadd.s32 %s16, 1
      %s25 = sadd.s32 %s24, 1
      %p28 = scmp.eq.s32.totalorder %s16, 3
      %p29 = scmp.ne.s32.totalorder %s24, %s26
      %p30 = scmp.eq.s32.totalorder %s16, 0
      %p31 = por %p29, %p30
      %p32 = scmp.ne.s32.totalorder %s24, %s26
      %p33 = scmp.eq.s32.totalorder %s21, 3
      %p34 = por %p32, %p33
      %p35 = scmp.ne.s32.totalorder %s26, %s27
      %p36 = scmp.eq.s32.totalorder %s21, 0
      %p37 = por %p35, %p36
      %p38 = scmp.ne.s32.totalorder %s26, %s27
      %p39 = scmp.eq.s32.totalorder %s22, 3
      %p40 = por %p38, %p39
      %p42 = scmp.ne.s32.totalorder %s27, %s41
      %p43 = scmp.eq.s32.totalorder %s22, 0
      %p44 = por %p42, %p43
      %s45 = ssub.s32 %s16, %s23
      %p46 = scmp.eq.s32.totalorder %s45, 0
      %s48 = sadd.s32 %s47, 1
      %s49 = scalar_select %p46, %s47, %s48
      %p52 = pneg %p46
      %p53 = scmp.eq.s32.totalorder %s16, 3
      %p54 = por %p52, %p53
      %p55 = scmp.ne.s32.totalorder %s47, %s50
      %p56 = scmp.eq.s32.totalorder %s16, 0
      %p57 = por %p55, %p56
      %p58 = scmp.ne.s32.totalorder %s47, %s50
      %p59 = scmp.eq.s32.totalorder %s21, 3
      %p60 = por %p58, %p59
      %p61 = scmp.ne.s32.totalorder %s50, %s51
      %p62 = scmp.eq.s32.totalorder %s21, 0
      %p63 = por %p61, %p62
      %p64 = scmp.ne.s32.totalorder %s50, %s51
      %p65 = scmp.eq.s32.totalorder %s22, 3
      %p66 = por %p64, %p65
      %p68 = scmp.ne.s32.totalorder %s51, %s67
      %p69 = scmp.eq.s32.totalorder %s22, 0
      %p70 = por %p68, %p69
      %s71 = ssub.s32 %s16, %s23
      %p72 = scmp.eq.s32.totalorder %s71, 0
      %s74 = sadd.s32 %s73, 1
      %s75 = scalar_select %p72, %s73, %s74
      %p78 = pneg %p72
      %p79 = scmp.eq.s32.totalorder %s16, 3
      %p80 = por %p78, %p79
      %p81 = scmp.ne.s32.totalorder %s73, %s76
      %p82 = scmp.eq.s32.totalorder %s16, 0
      %p83 = por %p81, %p82
      %p84 = scmp.ne.s32.totalorder %s73, %s76
      %p85 = scmp.eq.s32.totalorder %s21, 3
      %p86 = por %p84, %p85
      %p87 = scmp.ne.s32.totalorder %s76, %s77
      %p88 = scmp.eq.s32.totalorder %s21, 0
      %p89 = por %p87, %p88
      %p90 = scmp.ne.s32.totalorder %s76, %s77
      %p91 = scmp.eq.s32.totalorder %s22, 3
      %p92 = por %p90, %p91
      %p94 = scmp.ne.s32.totalorder %s77, %s93
      %p95 = scmp.eq.s32.totalorder %s22, 0
      %p96 = por %p94, %p95
      %s97 = ssub.s32 %s16, %s23
      %p98 = scmp.eq.s32.totalorder %s97, 0
      %s100 = sadd.s32 %s99, 1
      %s101 = scalar_select %p98, %s99, %s100
      %p104 = pneg %p98
      %p105 = scmp.eq.s32.totalorder %s16, 3
      %p106 = por %p104, %p105
      %p107 = scmp.ne.s32.totalorder %s99, %s102
      %p108 = scmp.eq.s32.totalorder %s16, 0
      %p109 = por %p107, %p108
      %p110 = scmp.ne.s32.totalorder %s99, %s102
      %p111 = scmp.eq.s32.totalorder %s21, 3
      %p112 = por %p110, %p111
      %p113 = scmp.ne.s32.totalorder %s102, %s103
      %p114 = scmp.eq.s32.totalorder %s21, 0
      %p115 = por %p113, %p114
      %p116 = scmp.ne.s32.totalorder %s102, %s103
      %p117 = scmp.eq.s32.totalorder %s22, 3
      %p118 = por %p116, %p117
      %p120 = scmp.ne.s32.totalorder %s103, %s119
      %p121 = scmp.eq.s32.totalorder %s22, 0
      %p122 = por %p120, %p121
      %p123 = scmp.le.s32.totalorder 1, %s16
      %p124 = scmp.lt.s32.totalorder %s16, 5
      %p125 = pnand %p123, %p124
      %p126 = pneg %p125
      // Predicated region
      $region9: #{tpu_custom_call.1} parent=5 // pred_check
        _
      $region10: #{tpu_custom_call.1} parent=5 // pred_check_branch
        %128 = sbr.rel (%p125) target = $region12
      $region11: #{tpu_custom_call.1} parent=5 // pred_region
        %s129 = ssub.s32 %s16, 1
        // Predicated region
        $region13: #{tpu_custom_call.1} parent=11 // pred_check
          %p130 = pneg %p37
        $region14: #{tpu_custom_call.1} parent=11 // pred_check_branch
          %132 = sbr.rel (%p130) target = $region16
        $region15: #{tpu_custom_call.1} parent=11 // pred_region
          %s134 = ssub.s32 896, 896
          %135 = vsyncadd [#allocation3], %s134
          %s137 = sshll.u32 [#allocation2], 4
          %s138 = int_to_ptr.vmem [resolvable:$true] %s137
          %140 = dma.hbm_to_vmem [thread:$0]  %s0, 896, %s138, [#allocation3]
        $region16: #{tpu_custom_call.1} parent=11 // pred_fallthru
          _
      $region12: #{tpu_custom_call.1} parent=5 // pred_fallthru
        _
      %p141 = scmp.lt.s32.totalorder %s16, 4
      // Predicated region
      $region17: #{tpu_custom_call.1} parent=5 // pred_check
        %p142 = pneg %p141
      $region18: #{tpu_custom_call.1} parent=5 // pred_check_branch
        %144 = sbr.rel (%p142) target = $region20
      $region19: #{tpu_custom_call.1} parent=5 // pred_region
        // Predicated region
        $region21: #{tpu_custom_call.1} parent=19 // pred_check
          %p145 = pneg %p57
        $region22: #{tpu_custom_call.1} parent=19 // pred_check_branch
          %147 = sbr.rel (%p145) target = $region24
        $region23: #{tpu_custom_call.1} parent=19 // pred_region
          %s148 = sand.u32 %s16, 1
          %s149 = scalar_lea.sflag [#allocation6], %s148
          %s150 = sand.u32 %s47, 1
          %s151 = smul.addr %s150, 7840
          %s152 = scalar_lea.vmem [#allocation5], %s151
          %s153 = smul.u32 10, %s16
          %s155 = ssub.s32 125440, 125440
          %156 = vsyncadd %s149, %s155
          %s157 = smul.addr %s153, 128
          %s158 = scalar_lea.hbm %s1, %s157
          %s159 = sshll.u32 %s152, 4
          %s160 = int_to_ptr.vmem [resolvable:$true] %s159
          %165 = dma.hbm_to_vmem [thread:$0]  %s158, 125440, %s160, %s149, 5120, 1280, 80
        $region24: #{tpu_custom_call.1} parent=19 // pred_fallthru
          _
        // Predicated region
        $region25: #{tpu_custom_call.1} parent=19 // pred_check
          %p166 = pneg %p83
        $region26: #{tpu_custom_call.1} parent=19 // pred_check_branch
          %168 = sbr.rel (%p166) target = $region28
        $region27: #{tpu_custom_call.1} parent=19 // pred_region
          %s169 = sand.u32 %s16, 1
          %s170 = scalar_lea.sflag [#allocation6], %s169
          %s171 = sand.u32 %s73, 1
          %s172 = smul.addr %s171, 10
          %s173 = scalar_lea.vmem [#allocation7], %s172
          %s174 = smul.u32 10, %s16
          %s176 = ssub.s32 160, 160
          %177 = vsyncadd %s170, %s176
          %s178 = smul.addr %s174, 16
          %s179 = scalar_lea.hbm %s2, %s178
          %s181 = sshll.u32 %s173, 4
          %s182 = int_to_ptr.vmem [resolvable:$true] %s181
          %184 = dma.hbm_to_vmem [thread:$0]  %s179, 160, %s182, %s170
        $region28: #{tpu_custom_call.1} parent=19 // pred_fallthru
          _
      $region20: #{tpu_custom_call.1} parent=5 // pred_fallthru
        _
      %p185 = scmp.le.s32.totalorder 1, %s16
      %p186 = scmp.lt.s32.totalorder %s16, 5
      %p187 = pnand %p185, %p186
      %p188 = pneg %p187
      // Predicated region
      $region29: #{tpu_custom_call.1} parent=5 // pred_check
        _
      $region30: #{tpu_custom_call.1} parent=5 // pred_check_branch
        %190 = sbr.rel (%p187) target = $region32
      $region31: #{tpu_custom_call.1} parent=5 // pred_region
        %s191 = ssub.s32 %s16, 1
        // Predicated region
        $region33: #{tpu_custom_call.1} parent=31 // pred_check
          %p192 = pneg %p37
        $region34: #{tpu_custom_call.1} parent=31 // pred_check_branch
          %194 = sbr.rel (%p192) target = $region36
        $region35: #{tpu_custom_call.1} parent=31 // pred_region
          %195 = dma.done [#allocation3], 896
        $region36: #{tpu_custom_call.1} parent=31 // pred_fallthru
          _
        %s196 = sand.u32 %s21, 1
        %s197 = scalar_lea.sflag [#allocation6], %s196
        %s198 = sand.u32 %s50, 1
        %s199 = smul.addr %s198, 7840
        %s200 = scalar_lea.vmem [#allocation5], %s199
        // Predicated region
        $region37: #{tpu_custom_call.1} parent=31 // pred_check
          %p201 = pneg %p63
        $region38: #{tpu_custom_call.1} parent=31 // pred_check_branch
          %203 = sbr.rel (%p201) target = $region40
        $region39: #{tpu_custom_call.1} parent=31 // pred_region
          %204 = dma.done %s197, 125440
        $region40: #{tpu_custom_call.1} parent=31 // pred_fallthru
          _
        %s205 = sand.u32 %s21, 1
        %s206 = scalar_lea.sflag [#allocation6], %s205
        %s207 = sand.u32 %s76, 1
        %s208 = smul.addr %s207, 10
        %s209 = scalar_lea.vmem [#allocation7], %s208
        // Predicated region
        $region41: #{tpu_custom_call.1} parent=31 // pred_check
          %p210 = pneg %p89
        $region42: #{tpu_custom_call.1} parent=31 // pred_check_branch
          %212 = sbr.rel (%p210) target = $region44
        $region43: #{tpu_custom_call.1} parent=31 // pred_region
          %213 = dma.done %s206, 160
        $region44: #{tpu_custom_call.1} parent=31 // pred_fallthru
          _
        %p214 = pneg %p37
        %p215 = pneg %p34
        %s216 = sand.u32 %s21, 1
        %s217 = scalar_lea.sflag [#allocation6], %s216
        %s218 = sand.u32 %s50, 1
        %s219 = smul.addr %s218, 7840
        %s220 = scalar_lea.vmem [#allocation5], %s219
        %p221 = pneg %p63
        %p222 = pneg %p60
        %s223 = sand.u32 %s21, 1
        %s224 = scalar_lea.sflag [#allocation6], %s223
        %s225 = sand.u32 %s76, 1
        %s226 = smul.addr %s225, 10
        %s227 = scalar_lea.vmem [#allocation7], %s226
        %p228 = pneg %p89
        %p229 = pneg %p86
        %p230 = pneg %p115
        %p231 = pneg %p112
        %s232 = sand.u32 %s102, 1
        %s233 = scalar_lea.sflag [#allocation4], %s232
        %s234 = sand.u32 %s102, 1
        %s235 = smul.addr %s234, 80
        %s236 = scalar_lea.vmem [#allocation8], %s235
        %s237 = smul.u32 10, %s21
        %s238 = smul.u32 10, %s21
        %s239 = smul.u32 10, %s21
        %v240 = vld [vmem:[#allocation2] sm:$0xff]
        %v241 = vld [vmem:[#allocation2 + $0x8] sm:$0xff]
        %v242 = vld [vmem:[#allocation2 + $0x10] sm:$0xff]
        %v243 = vld [vmem:[#allocation2 + $0x18] sm:$0xff]
        %v244 = vld [vmem:[#allocation2 + $0x20] sm:$0xff]
        %v245 = vld [vmem:[#allocation2 + $0x28] sm:$0xff]
        %v246 = vld [vmem:[#allocation2 + $0x30] sm:$0xff]
        %v247 = vld [vmem:[%s200] sm:$0xff]
        %v248 = vld [vmem:[%s200 + $0x8] sm:$0xff]
        %v249 = vld [vmem:[%s200 + $0x10] sm:$0xff]
        %v250 = vld [vmem:[%s200 + $0x18] sm:$0xff]
        %v251 = vld [vmem:[%s200 + $0x20] sm:$0xff]
        %v252 = vld [vmem:[%s200 + $0x28] sm:$0xff]
        %v253 = vld [vmem:[%s200 + $0x30] sm:$0xff]
        %v254 = vld [vmem:[%s200 + $0x38] sm:$0xff]
        %v255 = vld [vmem:[%s200 + $0x40] sm:$0xff]
        %v256 = vld [vmem:[%s200 + $0x48] sm:$0xff]
        %v257 = vld [vmem:[%s200 + $0x50] sm:$0xff]
        %v258 = vld [vmem:[%s200 + $0x58] sm:$0xff]
        %v259 = vld [vmem:[%s200 + $0x60] sm:$0xff]
        %v260 = vld [vmem:[%s200 + $0x68] sm:$0xff]
        %v261 = vld [vmem:[%s200 + $0x70] sm:$0xff]
        %v262 = vld [vmem:[%s200 + $0x78] sm:$0xff]
        %v263 = vld [vmem:[%s200 + $0x80] sm:$0xff]
        %v264 = vld [vmem:[%s200 + $0x88] sm:$0xff]
        %v265 = vld [vmem:[%s200 + $0x90] sm:$0xff]
        %v266 = vld [vmem:[%s200 + $0x98] sm:$0xff]
        %v267 = vld [vmem:[%s200 + $0xa0] sm:$0xff]
        %v268 = vld [vmem:[%s200 + $0xa8] sm:$0xff]
        %v269 = vld [vmem:[%s200 + $0xb0] sm:$0xff]
        %v270 = vld [vmem:[%s200 + $0xb8] sm:$0xff]
        %v271 = vld [vmem:[%s200 + $0xc0] sm:$0xff]
        %v272 = vld [vmem:[%s200 + $0xc8] sm:$0xff]
        %v273 = vld [vmem:[%s200 + $0xd0] sm:$0xff]
        %v274 = vld [vmem:[%s200 + $0xd8] sm:$0xff]
        %v275 = vld [vmem:[%s200 + $0xe0] sm:$0xff]
        %v276 = vld [vmem:[%s200 + $0xe8] sm:$0xff]
        %v277 = vld [vmem:[%s200 + $0xf0] sm:$0xff]
        %v278 = vld [vmem:[%s200 + $0xf8] sm:$0xff]
        %v279 = vld [vmem:[%s200 + $0x100] sm:$0xff]
        %v280 = vld [vmem:[%s200 + $0x108] sm:$0xff]
        %v281 = vld [vmem:[%s200 + $0x110] sm:$0xff]
        %v282 = vld [vmem:[%s200 + $0x118] sm:$0xff]
        %v283 = vld [vmem:[%s200 + $0x120] sm:$0xff]
        %v284 = vld [vmem:[%s200 + $0x128] sm:$0xff]
        %v285 = vld [vmem:[%s200 + $0x130] sm:$0xff]
        %v286 = vld [vmem:[%s200 + $0x138] sm:$0xff]
        %v287 = vld [vmem:[%s200 + $0x140] sm:$0xff]
        %v288 = vld [vmem:[%s200 + $0x148] sm:$0xff]
        %v289 = vld [vmem:[%s200 + $0x150] sm:$0xff]
        %v290 = vld [vmem:[%s200 + $0x158] sm:$0xff]
        %v291 = vld [vmem:[%s200 + $0x160] sm:$0xff]
        %v292 = vld [vmem:[%s200 + $0x168] sm:$0xff]
        %v293 = vld [vmem:[%s200 + $0x170] sm:$0xff]
        %v294 = vld [vmem:[%s200 + $0x178] sm:$0xff]
        %v295 = vld [vmem:[%s200 + $0x180] sm:$0xff]
        %v296 = vld [vmem:[%s200 + $0x188] sm:$0xff]
        %v297 = vld [vmem:[%s200 + $0x190] sm:$0xff]
        %v298 = vld [vmem:[%s200 + $0x198] sm:$0xff]
        %v299 = vld [vmem:[%s200 + $0x1a0] sm:$0xff]
        %v300 = vld [vmem:[%s200 + $0x1a8] sm:$0xff]
        %v301 = vld [vmem:[%s200 + $0x1b0] sm:$0xff]
        %v302 = vld [vmem:[%s200 + $0x1b8] sm:$0xff]
        %v303 = vld [vmem:[%s200 + $0x1c0] sm:$0xff]
        %v304 = vld [vmem:[%s200 + $0x1c8] sm:$0xff]
        %v305 = vld [vmem:[%s200 + $0x1d0] sm:$0xff]
        %v306 = vld [vmem:[%s200 + $0x1d8] sm:$0xff]
        %v307 = vld [vmem:[%s200 + $0x1e0] sm:$0xff]
        %v308 = vld [vmem:[%s200 + $0x1e8] sm:$0xff]
        %v309 = vld [vmem:[%s200 + $0x1f0] sm:$0xff]
        %v310 = vld [vmem:[%s200 + $0x1f8] sm:$0xff]
        %v311 = vld [vmem:[%s200 + $0x200] sm:$0xff]
        %v312 = vld [vmem:[%s200 + $0x208] sm:$0xff]
        %v313 = vld [vmem:[%s200 + $0x210] sm:$0xff]
        %v314 = vld [vmem:[%s200 + $0x218] sm:$0xff]
        %v315 = vld [vmem:[%s200 + $0x220] sm:$0xff]
        %v316 = vld [vmem:[%s200 + $0x228] sm:$0xff]
        %v317 = vld [vmem:[%s200 + $0x230] sm:$0xff]
        %v318 = vld [vmem:[%s200 + $0x238] sm:$0xff]
        %v319 = vld [vmem:[%s200 + $0x240] sm:$0xff]
        %v320 = vld [vmem:[%s200 + $0x248] sm:$0xff]
        %v321 = vld [vmem:[%s200 + $0x250] sm:$0xff]
        %v322 = vld [vmem:[%s200 + $0x258] sm:$0xff]
        %v323 = vld [vmem:[%s200 + $0x260] sm:$0xff]
        %v324 = vld [vmem:[%s200 + $0x268] sm:$0xff]
        %v325 = vld [vmem:[%s200 + $0x270] sm:$0xff]
        %v326 = vld [vmem:[%s200 + $0x278] sm:$0xff]
        %v327 = vld [vmem:[%s200 + $0x280] sm:$0xff]
        %v328 = vld [vmem:[%s200 + $0x288] sm:$0xff]
        %v329 = vld [vmem:[%s200 + $0x290] sm:$0xff]
        %v330 = vld [vmem:[%s200 + $0x298] sm:$0xff]
        %v331 = vld [vmem:[%s200 + $0x2a0] sm:$0xff]
        %v332 = vld [vmem:[%s200 + $0x2a8] sm:$0xff]
        %v333 = vld [vmem:[%s200 + $0x2b0] sm:$0xff]
        %v334 = vld [vmem:[%s200 + $0x2b8] sm:$0xff]
        %v335 = vld [vmem:[%s200 + $0x2c0] sm:$0xff]
        %v336 = vld [vmem:[%s200 + $0x2c8] sm:$0xff]
        %v337 = vld [vmem:[%s200 + $0x2d0] sm:$0xff]
        %v338 = vld [vmem:[%s200 + $0x2d8] sm:$0xff]
        %v339 = vld [vmem:[%s200 + $0x2e0] sm:$0xff]
        %v340 = vld [vmem:[%s200 + $0x2e8] sm:$0xff]
        %v341 = vld [vmem:[%s200 + $0x2f0] sm:$0xff]
        %v342 = vld [vmem:[%s200 + $0x2f8] sm:$0xff]
        %v343 = vld [vmem:[%s200 + $0x300] sm:$0xff]
        %v344 = vld [vmem:[%s200 + $0x308] sm:$0xff]
        %v345 = vld [vmem:[%s200 + $0x310] sm:$0xff]
        %v346 = vld [vmem:[%s200 + $0x318] sm:$0xff]
        %v347 = vld [vmem:[%s200 + $0x320] sm:$0xff]
        %v348 = vld [vmem:[%s200 + $0x328] sm:$0xff]
        %v349 = vld [vmem:[%s200 + $0x330] sm:$0xff]
        %v350 = vld [vmem:[%s200 + $0x338] sm:$0xff]
        %v351 = vld [vmem:[%s200 + $0x340] sm:$0xff]
        %v352 = vld [vmem:[%s200 + $0x348] sm:$0xff]
        %v353 = vld [vmem:[%s200 + $0x350] sm:$0xff]
        %v354 = vld [vmem:[%s200 + $0x358] sm:$0xff]
        %v355 = vld [vmem:[%s200 + $0x360] sm:$0xff]
        %v356 = vld [vmem:[%s200 + $0x368] sm:$0xff]
        %v357 = vld [vmem:[%s200 + $0x370] sm:$0xff]
        %v358 = vld [vmem:[%s200 + $0x378] sm:$0xff]
        %v359 = vld [vmem:[%s200 + $0x380] sm:$0xff]
        %v360 = vld [vmem:[%s200 + $0x388] sm:$0xff]
        %v361 = vld [vmem:[%s200 + $0x390] sm:$0xff]
        %v362 = vld [vmem:[%s200 + $0x398] sm:$0xff]
        %v363 = vld [vmem:[%s200 + $0x3a0] sm:$0xff]
        %v364 = vld [vmem:[%s200 + $0x3a8] sm:$0xff]
        %v365 = vld [vmem:[%s200 + $0x3b0] sm:$0xff]
        %v366 = vld [vmem:[%s200 + $0x3b8] sm:$0xff]
        %v367 = vld [vmem:[%s200 + $0x3c0] sm:$0xff]
        %v368 = vld [vmem:[%s200 + $0x3c8] sm:$0xff]
        %v369 = vld [vmem:[%s200 + $0x3d0] sm:$0xff]
        %v370 = vld [vmem:[%s200 + $0x3d8] sm:$0xff]
        %v371 = vld [vmem:[%s200 + $0x3e0] sm:$0xff]
        %v372 = vld [vmem:[%s200 + $0x3e8] sm:$0xff]
        %v373 = vld [vmem:[%s200 + $0x3f0] sm:$0xff]
        %v374 = vld [vmem:[%s200 + $0x3f8] sm:$0xff]
        %v375 = vld [vmem:[%s200 + $0x400] sm:$0xff]
        %v376 = vld [vmem:[%s200 + $0x408] sm:$0xff]
        %v377 = vld [vmem:[%s200 + $0x410] sm:$0xff]
        %v378 = vld [vmem:[%s200 + $0x418] sm:$0xff]
        %v379 = vld [vmem:[%s200 + $0x420] sm:$0xff]
        %v380 = vld [vmem:[%s200 + $0x428] sm:$0xff]
        %v381 = vld [vmem:[%s200 + $0x430] sm:$0xff]
        %v382 = vld [vmem:[%s200 + $0x438] sm:$0xff]
        %v383 = vld [vmem:[%s200 + $0x440] sm:$0xff]
        %v384 = vld [vmem:[%s200 + $0x448] sm:$0xff]
        %v385 = vld [vmem:[%s200 + $0x450] sm:$0xff]
        %v386 = vld [vmem:[%s200 + $0x458] sm:$0xff]
        %v387 = vld [vmem:[%s200 + $0x460] sm:$0xff]
        %v388 = vld [vmem:[%s200 + $0x468] sm:$0xff]
        %v389 = vld [vmem:[%s200 + $0x470] sm:$0xff]
        %v390 = vld [vmem:[%s200 + $0x478] sm:$0xff]
        %v391 = vld [vmem:[%s200 + $0x480] sm:$0xff]
        %v392 = vld [vmem:[%s200 + $0x488] sm:$0xff]
        %v393 = vld [vmem:[%s200 + $0x490] sm:$0xff]
        %v394 = vld [vmem:[%s200 + $0x498] sm:$0xff]
        %v395 = vld [vmem:[%s200 + $0x4a0] sm:$0xff]
        %v396 = vld [vmem:[%s200 + $0x4a8] sm:$0xff]
        %v397 = vld [vmem:[%s200 + $0x4b0] sm:$0xff]
        %v398 = vld [vmem:[%s200 + $0x4b8] sm:$0xff]
        %v399 = vld [vmem:[%s200 + $0x4c0] sm:$0xff]
        %v400 = vld [vmem:[%s200 + $0x4c8] sm:$0xff]
        %v401 = vld [vmem:[%s200 + $0x4d0] sm:$0xff]
        %v402 = vld [vmem:[%s200 + $0x4d8] sm:$0xff]
        %v403 = vld [vmem:[%s200 + $0x4e0] sm:$0xff]
        %v404 = vld [vmem:[%s200 + $0x4e8] sm:$0xff]
        %v405 = vld [vmem:[%s200 + $0x4f0] sm:$0xff]
        %v406 = vld [vmem:[%s200 + $0x4f8] sm:$0xff]
        %v407 = vld [vmem:[%s200 + $0x500] sm:$0xff]
        %v408 = vld [vmem:[%s200 + $0x508] sm:$0xff]
        %v409 = vld [vmem:[%s200 + $0x510] sm:$0xff]
        %v410 = vld [vmem:[%s200 + $0x518] sm:$0xff]
        %v411 = vld [vmem:[%s200 + $0x520] sm:$0xff]
        %v412 = vld [vmem:[%s200 + $0x528] sm:$0xff]
        %v413 = vld [vmem:[%s200 + $0x530] sm:$0xff]
        %v414 = vld [vmem:[%s200 + $0x538] sm:$0xff]
        %v415 = vld [vmem:[%s200 + $0x540] sm:$0xff]
        %v416 = vld [vmem:[%s200 + $0x548] sm:$0xff]
        %v417 = vld [vmem:[%s200 + $0x550] sm:$0xff]
        %v418 = vld [vmem:[%s200 + $0x558] sm:$0xff]
        %v419 = vld [vmem:[%s200 + $0x560] sm:$0xff]
        %v420 = vld [vmem:[%s200 + $0x568] sm:$0xff]
        %v421 = vld [vmem:[%s200 + $0x570] sm:$0xff]
        %v422 = vld [vmem:[%s200 + $0x578] sm:$0xff]
        %v423 = vld [vmem:[%s200 + $0x580] sm:$0xff]
        %v424 = vld [vmem:[%s200 + $0x588] sm:$0xff]
        %v425 = vld [vmem:[%s200 + $0x590] sm:$0xff]
        %v426 = vld [vmem:[%s200 + $0x598] sm:$0xff]
        %v427 = vld [vmem:[%s200 + $0x5a0] sm:$0xff]
        %v428 = vld [vmem:[%s200 + $0x5a8] sm:$0xff]
        %v429 = vld [vmem:[%s200 + $0x5b0] sm:$0xff]
        %v430 = vld [vmem:[%s200 + $0x5b8] sm:$0xff]
        %v431 = vld [vmem:[%s200 + $0x5c0] sm:$0xff]
        %v432 = vld [vmem:[%s200 + $0x5c8] sm:$0xff]
        %v433 = vld [vmem:[%s200 + $0x5d0] sm:$0xff]
        %v434 = vld [vmem:[%s200 + $0x5d8] sm:$0xff]
        %v435 = vld [vmem:[%s200 + $0x5e0] sm:$0xff]
        %v436 = vld [vmem:[%s200 + $0x5e8] sm:$0xff]
        %v437 = vld [vmem:[%s200 + $0x5f0] sm:$0xff]
        %v438 = vld [vmem:[%s200 + $0x5f8] sm:$0xff]
        %v439 = vld [vmem:[%s200 + $0x600] sm:$0xff]
        %v440 = vld [vmem:[%s200 + $0x608] sm:$0xff]
        %v441 = vld [vmem:[%s200 + $0x610] sm:$0xff]
        %v442 = vld [vmem:[%s200 + $0x618] sm:$0xff]
        %v443 = vld [vmem:[%s200 + $0x620] sm:$0xff]
        %v444 = vld [vmem:[%s200 + $0x628] sm:$0xff]
        %v445 = vld [vmem:[%s200 + $0x630] sm:$0xff]
        %v446 = vld [vmem:[%s200 + $0x638] sm:$0xff]
        %v447 = vld [vmem:[%s200 + $0x640] sm:$0xff]
        %v448 = vld [vmem:[%s200 + $0x648] sm:$0xff]
        %v449 = vld [vmem:[%s200 + $0x650] sm:$0xff]
        %v450 = vld [vmem:[%s200 + $0x658] sm:$0xff]
        %v451 = vld [vmem:[%s200 + $0x660] sm:$0xff]
        %v452 = vld [vmem:[%s200 + $0x668] sm:$0xff]
        %v453 = vld [vmem:[%s200 + $0x670] sm:$0xff]
        %v454 = vld [vmem:[%s200 + $0x678] sm:$0xff]
        %v455 = vld [vmem:[%s200 + $0x680] sm:$0xff]
        %v456 = vld [vmem:[%s200 + $0x688] sm:$0xff]
        %v457 = vld [vmem:[%s200 + $0x690] sm:$0xff]
        %v458 = vld [vmem:[%s200 + $0x698] sm:$0xff]
        %v459 = vld [vmem:[%s200 + $0x6a0] sm:$0xff]
        %v460 = vld [vmem:[%s200 + $0x6a8] sm:$0xff]
        %v461 = vld [vmem:[%s200 + $0x6b0] sm:$0xff]
        %v462 = vld [vmem:[%s200 + $0x6b8] sm:$0xff]
        %v463 = vld [vmem:[%s200 + $0x6c0] sm:$0xff]
        %v464 = vld [vmem:[%s200 + $0x6c8] sm:$0xff]
        %v465 = vld [vmem:[%s200 + $0x6d0] sm:$0xff]
        %v466 = vld [vmem:[%s200 + $0x6d8] sm:$0xff]
        %v467 = vld [vmem:[%s200 + $0x6e0] sm:$0xff]
        %v468 = vld [vmem:[%s200 + $0x6e8] sm:$0xff]
        %v469 = vld [vmem:[%s200 + $0x6f0] sm:$0xff]
        %v470 = vld [vmem:[%s200 + $0x6f8] sm:$0xff]
        %v471 = vld [vmem:[%s200 + $0x700] sm:$0xff]
        %v472 = vld [vmem:[%s200 + $0x708] sm:$0xff]
        %v473 = vld [vmem:[%s200 + $0x710] sm:$0xff]
        %v474 = vld [vmem:[%s200 + $0x718] sm:$0xff]
        %v475 = vld [vmem:[%s200 + $0x720] sm:$0xff]
        %v476 = vld [vmem:[%s200 + $0x728] sm:$0xff]
        %v477 = vld [vmem:[%s200 + $0x730] sm:$0xff]
        %v478 = vld [vmem:[%s200 + $0x738] sm:$0xff]
        %v479 = vld [vmem:[%s200 + $0x740] sm:$0xff]
        %v480 = vld [vmem:[%s200 + $0x748] sm:$0xff]
        %v481 = vld [vmem:[%s200 + $0x750] sm:$0xff]
        %v482 = vld [vmem:[%s200 + $0x758] sm:$0xff]
        %v483 = vld [vmem:[%s200 + $0x760] sm:$0xff]
        %v484 = vld [vmem:[%s200 + $0x768] sm:$0xff]
        %v485 = vld [vmem:[%s200 + $0x770] sm:$0xff]
        %v486 = vld [vmem:[%s200 + $0x778] sm:$0xff]
        %v487 = vld [vmem:[%s200 + $0x780] sm:$0xff]
        %v488 = vld [vmem:[%s200 + $0x788] sm:$0xff]
        %v489 = vld [vmem:[%s200 + $0x790] sm:$0xff]
        %v490 = vld [vmem:[%s200 + $0x798] sm:$0xff]
        %v491 = vld [vmem:[%s200 + $0x7a0] sm:$0xff]
        %v492 = vld [vmem:[%s200 + $0x7a8] sm:$0xff]
        %v493 = vld [vmem:[%s200 + $0x7b0] sm:$0xff]
        %v494 = vld [vmem:[%s200 + $0x7b8] sm:$0xff]
        %v495 = vld [vmem:[%s200 + $0x7c0] sm:$0xff]
        %v496 = vld [vmem:[%s200 + $0x7c8] sm:$0xff]
        %v497 = vld [vmem:[%s200 + $0x7d0] sm:$0xff]
        %v498 = vld [vmem:[%s200 + $0x7d8] sm:$0xff]
        %v499 = vld [vmem:[%s200 + $0x7e0] sm:$0xff]
        %v500 = vld [vmem:[%s200 + $0x7e8] sm:$0xff]
        %v501 = vld [vmem:[%s200 + $0x7f0] sm:$0xff]
        %v502 = vld [vmem:[%s200 + $0x7f8] sm:$0xff]
        %v503 = vld [vmem:[%s200 + $0x800] sm:$0xff]
        %v504 = vld [vmem:[%s200 + $0x808] sm:$0xff]
        %v505 = vld [vmem:[%s200 + $0x810] sm:$0xff]
        %v506 = vld [vmem:[%s200 + $0x818] sm:$0xff]
        %v507 = vld [vmem:[%s200 + $0x820] sm:$0xff]
        %v508 = vld [vmem:[%s200 + $0x828] sm:$0xff]
        %v509 = vld [vmem:[%s200 + $0x830] sm:$0xff]
        %v510 = vld [vmem:[%s200 + $0x838] sm:$0xff]
        %v511 = vld [vmem:[%s200 + $0x840] sm:$0xff]
        %v512 = vld [vmem:[%s200 + $0x848] sm:$0xff]
        %v513 = vld [vmem:[%s200 + $0x850] sm:$0xff]
        %v514 = vld [vmem:[%s200 + $0x858] sm:$0xff]
        %v515 = vld [vmem:[%s200 + $0x860] sm:$0xff]
        %v516 = vld [vmem:[%s200 + $0x868] sm:$0xff]
        %v517 = vld [vmem:[%s200 + $0x870] sm:$0xff]
        %v518 = vld [vmem:[%s200 + $0x878] sm:$0xff]
        %v519 = vld [vmem:[%s200 + $0x880] sm:$0xff]
        %v520 = vld [vmem:[%s200 + $0x888] sm:$0xff]
        %v521 = vld [vmem:[%s200 + $0x890] sm:$0xff]
        %v522 = vld [vmem:[%s200 + $0x898] sm:$0xff]
        %v523 = vld [vmem:[%s200 + $0x8a0] sm:$0xff]
        %v524 = vld [vmem:[%s200 + $0x8a8] sm:$0xff]
        %v525 = vld [vmem:[%s200 + $0x8b0] sm:$0xff]
        %v526 = vld [vmem:[%s200 + $0x8b8] sm:$0xff]
        %v527 = vld [vmem:[%s200 + $0x8c0] sm:$0xff]
        %v528 = vld [vmem:[%s200 + $0x8c8] sm:$0xff]
        %v529 = vld [vmem:[%s200 + $0x8d0] sm:$0xff]
        %v530 = vld [vmem:[%s200 + $0x8d8] sm:$0xff]
        %v531 = vld [vmem:[%s200 + $0x8e0] sm:$0xff]
        %v532 = vld [vmem:[%s200 + $0x8e8] sm:$0xff]
        %v533 = vld [vmem:[%s200 + $0x8f0] sm:$0xff]
        %v534 = vld [vmem:[%s200 + $0x8f8] sm:$0xff]
        %v535 = vld [vmem:[%s200 + $0x900] sm:$0xff]
        %v536 = vld [vmem:[%s200 + $0x908] sm:$0xff]
        %v537 = vld [vmem:[%s200 + $0x910] sm:$0xff]
        %v538 = vld [vmem:[%s200 + $0x918] sm:$0xff]
        %v539 = vld [vmem:[%s200 + $0x920] sm:$0xff]
        %v540 = vld [vmem:[%s200 + $0x928] sm:$0xff]
        %v541 = vld [vmem:[%s200 + $0x930] sm:$0xff]
        %v542 = vld [vmem:[%s200 + $0x938] sm:$0xff]
        %v543 = vld [vmem:[%s200 + $0x940] sm:$0xff]
        %v544 = vld [vmem:[%s200 + $0x948] sm:$0xff]
        %v545 = vld [vmem:[%s200 + $0x950] sm:$0xff]
        %v546 = vld [vmem:[%s200 + $0x958] sm:$0xff]
        %v547 = vld [vmem:[%s200 + $0x960] sm:$0xff]
        %v548 = vld [vmem:[%s200 + $0x968] sm:$0xff]
        %v549 = vld [vmem:[%s200 + $0x970] sm:$0xff]
        %v550 = vld [vmem:[%s200 + $0x978] sm:$0xff]
        %v551 = vld [vmem:[%s200 + $0x980] sm:$0xff]
        %v552 = vld [vmem:[%s200 + $0x988] sm:$0xff]
        %v553 = vld [vmem:[%s200 + $0x990] sm:$0xff]
        %v554 = vld [vmem:[%s200 + $0x998] sm:$0xff]
        %v555 = vld [vmem:[%s200 + $0x9a0] sm:$0xff]
        %v556 = vld [vmem:[%s200 + $0x9a8] sm:$0xff]
        %v557 = vld [vmem:[%s200 + $0x9b0] sm:$0xff]
        %v558 = vld [vmem:[%s200 + $0x9b8] sm:$0xff]
        %v559 = vld [vmem:[%s200 + $0x9c0] sm:$0xff]
        %v560 = vld [vmem:[%s200 + $0x9c8] sm:$0xff]
        %v561 = vld [vmem:[%s200 + $0x9d0] sm:$0xff]
        %v562 = vld [vmem:[%s200 + $0x9d8] sm:$0xff]
        %v563 = vld [vmem:[%s200 + $0x9e0] sm:$0xff]
        %v564 = vld [vmem:[%s200 + $0x9e8] sm:$0xff]
        %v565 = vld [vmem:[%s200 + $0x9f0] sm:$0xff]
        %v566 = vld [vmem:[%s200 + $0x9f8] sm:$0xff]
        %v567 = vld [vmem:[%s200 + $0xa00] sm:$0xff]
        %v568 = vld [vmem:[%s200 + $0xa08] sm:$0xff]
        %v569 = vld [vmem:[%s200 + $0xa10] sm:$0xff]
        %v570 = vld [vmem:[%s200 + $0xa18] sm:$0xff]
        %v571 = vld [vmem:[%s200 + $0xa20] sm:$0xff]
        %v572 = vld [vmem:[%s200 + $0xa28] sm:$0xff]
        %v573 = vld [vmem:[%s200 + $0xa30] sm:$0xff]
        %v574 = vld [vmem:[%s200 + $0xa38] sm:$0xff]
        %v575 = vld [vmem:[%s200 + $0xa40] sm:$0xff]
        %v576 = vld [vmem:[%s200 + $0xa48] sm:$0xff]
        %v577 = vld [vmem:[%s200 + $0xa50] sm:$0xff]
        %v578 = vld [vmem:[%s200 + $0xa58] sm:$0xff]
        %v579 = vld [vmem:[%s200 + $0xa60] sm:$0xff]
        %v580 = vld [vmem:[%s200 + $0xa68] sm:$0xff]
        %v581 = vld [vmem:[%s200 + $0xa70] sm:$0xff]
        %v582 = vld [vmem:[%s200 + $0xa78] sm:$0xff]
        %v583 = vld [vmem:[%s200 + $0xa80] sm:$0xff]
        %v584 = vld [vmem:[%s200 + $0xa88] sm:$0xff]
        %v585 = vld [vmem:[%s200 + $0xa90] sm:$0xff]
        %v586 = vld [vmem:[%s200 + $0xa98] sm:$0xff]
        %v587 = vld [vmem:[%s200 + $0xaa0] sm:$0xff]
        %v588 = vld [vmem:[%s200 + $0xaa8] sm:$0xff]
        %v589 = vld [vmem:[%s200 + $0xab0] sm:$0xff]
        %v590 = vld [vmem:[%s200 + $0xab8] sm:$0xff]
        %v591 = vld [vmem:[%s200 + $0xac0] sm:$0xff]
        %v592 = vld [vmem:[%s200 + $0xac8] sm:$0xff]
        %v593 = vld [vmem:[%s200 + $0xad0] sm:$0xff]
        %v594 = vld [vmem:[%s200 + $0xad8] sm:$0xff]
        %v595 = vld [vmem:[%s200 + $0xae0] sm:$0xff]
        %v596 = vld [vmem:[%s200 + $0xae8] sm:$0xff]
        %v597 = vld [vmem:[%s200 + $0xaf0] sm:$0xff]
        %v598 = vld [vmem:[%s200 + $0xaf8] sm:$0xff]
        %v599 = vld [vmem:[%s200 + $0xb00] sm:$0xff]
        %v600 = vld [vmem:[%s200 + $0xb08] sm:$0xff]
        %v601 = vld [vmem:[%s200 + $0xb10] sm:$0xff]
        %v602 = vld [vmem:[%s200 + $0xb18] sm:$0xff]
        %v603 = vld [vmem:[%s200 + $0xb20] sm:$0xff]
        %v604 = vld [vmem:[%s200 + $0xb28] sm:$0xff]
        %v605 = vld [vmem:[%s200 + $0xb30] sm:$0xff]
        %v606 = vld [vmem:[%s200 + $0xb38] sm:$0xff]
        %v607 = vld [vmem:[%s200 + $0xb40] sm:$0xff]
        %v608 = vld [vmem:[%s200 + $0xb48] sm:$0xff]
        %v609 = vld [vmem:[%s200 + $0xb50] sm:$0xff]
        %v610 = vld [vmem:[%s200 + $0xb58] sm:$0xff]
        %v611 = vld [vmem:[%s200 + $0xb60] sm:$0xff]
        %v612 = vld [vmem:[%s200 + $0xb68] sm:$0xff]
        %v613 = vld [vmem:[%s200 + $0xb70] sm:$0xff]
        %v614 = vld [vmem:[%s200 + $0xb78] sm:$0xff]
        %v615 = vld [vmem:[%s200 + $0xb80] sm:$0xff]
        %v616 = vld [vmem:[%s200 + $0xb88] sm:$0xff]
        %v617 = vld [vmem:[%s200 + $0xb90] sm:$0xff]
        %v618 = vld [vmem:[%s200 + $0xb98] sm:$0xff]
        %v619 = vld [vmem:[%s200 + $0xba0] sm:$0xff]
        %v620 = vld [vmem:[%s200 + $0xba8] sm:$0xff]
        %v621 = vld [vmem:[%s200 + $0xbb0] sm:$0xff]
        %v622 = vld [vmem:[%s200 + $0xbb8] sm:$0xff]
        %v623 = vld [vmem:[%s200 + $0xbc0] sm:$0xff]
        %v624 = vld [vmem:[%s200 + $0xbc8] sm:$0xff]
        %v625 = vld [vmem:[%s200 + $0xbd0] sm:$0xff]
        %v626 = vld [vmem:[%s200 + $0xbd8] sm:$0xff]
        %v627 = vld [vmem:[%s200 + $0xbe0] sm:$0xff]
        %v628 = vld [vmem:[%s200 + $0xbe8] sm:$0xff]
        %v629 = vld [vmem:[%s200 + $0xbf0] sm:$0xff]
        %v630 = vld [vmem:[%s200 + $0xbf8] sm:$0xff]
        %v631 = vld [vmem:[%s200 + $0xc00] sm:$0xff]
        %v632 = vld [vmem:[%s200 + $0xc08] sm:$0xff]
        %v633 = vld [vmem:[%s200 + $0xc10] sm:$0xff]
        %v634 = vld [vmem:[%s200 + $0xc18] sm:$0xff]
        %v635 = vld [vmem:[%s200 + $0xc20] sm:$0xff]
        %v636 = vld [vmem:[%s200 + $0xc28] sm:$0xff]
        %v637 = vld [vmem:[%s200 + $0xc30] sm:$0xff]
        %v638 = vld [vmem:[%s200 + $0xc38] sm:$0xff]
        %v639 = vld [vmem:[%s200 + $0xc40] sm:$0xff]
        %v640 = vld [vmem:[%s200 + $0xc48] sm:$0xff]
        %v641 = vld [vmem:[%s200 + $0xc50] sm:$0xff]
        %v642 = vld [vmem:[%s200 + $0xc58] sm:$0xff]
        %v643 = vld [vmem:[%s200 + $0xc60] sm:$0xff]
        %v644 = vld [vmem:[%s200 + $0xc68] sm:$0xff]
        %v645 = vld [vmem:[%s200 + $0xc70] sm:$0xff]
        %v646 = vld [vmem:[%s200 + $0xc78] sm:$0xff]
        %v647 = vld [vmem:[%s200 + $0xc80] sm:$0xff]
        %v648 = vld [vmem:[%s200 + $0xc88] sm:$0xff]
        %v649 = vld [vmem:[%s200 + $0xc90] sm:$0xff]
        %v650 = vld [vmem:[%s200 + $0xc98] sm:$0xff]
        %v651 = vld [vmem:[%s200 + $0xca0] sm:$0xff]
        %v652 = vld [vmem:[%s200 + $0xca8] sm:$0xff]
        %v653 = vld [vmem:[%s200 + $0xcb0] sm:$0xff]
        %v654 = vld [vmem:[%s200 + $0xcb8] sm:$0xff]
        %v655 = vld [vmem:[%s200 + $0xcc0] sm:$0xff]
        %v656 = vld [vmem:[%s200 + $0xcc8] sm:$0xff]
        %v657 = vld [vmem:[%s200 + $0xcd0] sm:$0xff]
        %v658 = vld [vmem:[%s200 + $0xcd8] sm:$0xff]
        %v659 = vld [vmem:[%s200 + $0xce0] sm:$0xff]
        %v660 = vld [vmem:[%s200 + $0xce8] sm:$0xff]
        %v661 = vld [vmem:[%s200 + $0xcf0] sm:$0xff]
        %v662 = vld [vmem:[%s200 + $0xcf8] sm:$0xff]
        %v663 = vld [vmem:[%s200 + $0xd00] sm:$0xff]
        %v664 = vld [vmem:[%s200 + $0xd08] sm:$0xff]
        %v665 = vld [vmem:[%s200 + $0xd10] sm:$0xff]
        %v666 = vld [vmem:[%s200 + $0xd18] sm:$0xff]
        %v667 = vld [vmem:[%s200 + $0xd20] sm:$0xff]
        %v668 = vld [vmem:[%s200 + $0xd28] sm:$0xff]
        %v669 = vld [vmem:[%s200 + $0xd30] sm:$0xff]
        %v670 = vld [vmem:[%s200 + $0xd38] sm:$0xff]
        %v671 = vld [vmem:[%s200 + $0xd40] sm:$0xff]
        %v672 = vld [vmem:[%s200 + $0xd48] sm:$0xff]
        %v673 = vld [vmem:[%s200 + $0xd50] sm:$0xff]
        %v674 = vld [vmem:[%s200 + $0xd58] sm:$0xff]
        %v675 = vld [vmem:[%s200 + $0xd60] sm:$0xff]
        %v676 = vld [vmem:[%s200 + $0xd68] sm:$0xff]
        %v677 = vld [vmem:[%s200 + $0xd70] sm:$0xff]
        %v678 = vld [vmem:[%s200 + $0xd78] sm:$0xff]
        %v679 = vld [vmem:[%s200 + $0xd80] sm:$0xff]
        %v680 = vld [vmem:[%s200 + $0xd88] sm:$0xff]
        %v681 = vld [vmem:[%s200 + $0xd90] sm:$0xff]
        %v682 = vld [vmem:[%s200 + $0xd98] sm:$0xff]
        %v683 = vld [vmem:[%s200 + $0xda0] sm:$0xff]
        %v684 = vld [vmem:[%s200 + $0xda8] sm:$0xff]
        %v685 = vld [vmem:[%s200 + $0xdb0] sm:$0xff]
        %v686 = vld [vmem:[%s200 + $0xdb8] sm:$0xff]
        %v687 = vld [vmem:[%s200 + $0xdc0] sm:$0xff]
        %v688 = vld [vmem:[%s200 + $0xdc8] sm:$0xff]
        %v689 = vld [vmem:[%s200 + $0xdd0] sm:$0xff]
        %v690 = vld [vmem:[%s200 + $0xdd8] sm:$0xff]
        %v691 = vld [vmem:[%s200 + $0xde0] sm:$0xff]
        %v692 = vld [vmem:[%s200 + $0xde8] sm:$0xff]
        %v693 = vld [vmem:[%s200 + $0xdf0] sm:$0xff]
        %v694 = vld [vmem:[%s200 + $0xdf8] sm:$0xff]
        %v695 = vld [vmem:[%s200 + $0xe00] sm:$0xff]
        %v696 = vld [vmem:[%s200 + $0xe08] sm:$0xff]
        %v697 = vld [vmem:[%s200 + $0xe10] sm:$0xff]
        %v698 = vld [vmem:[%s200 + $0xe18] sm:$0xff]
        %v699 = vld [vmem:[%s200 + $0xe20] sm:$0xff]
        %v700 = vld [vmem:[%s200 + $0xe28] sm:$0xff]
        %v701 = vld [vmem:[%s200 + $0xe30] sm:$0xff]
        %v702 = vld [vmem:[%s200 + $0xe38] sm:$0xff]
        %v703 = vld [vmem:[%s200 + $0xe40] sm:$0xff]
        %v704 = vld [vmem:[%s200 + $0xe48] sm:$0xff]
        %v705 = vld [vmem:[%s200 + $0xe50] sm:$0xff]
        %v706 = vld [vmem:[%s200 + $0xe58] sm:$0xff]
        %v707 = vld [vmem:[%s200 + $0xe60] sm:$0xff]
        %v708 = vld [vmem:[%s200 + $0xe68] sm:$0xff]
        %v709 = vld [vmem:[%s200 + $0xe70] sm:$0xff]
        %v710 = vld [vmem:[%s200 + $0xe78] sm:$0xff]
        %v711 = vld [vmem:[%s200 + $0xe80] sm:$0xff]
        %v712 = vld [vmem:[%s200 + $0xe88] sm:$0xff]
        %v713 = vld [vmem:[%s200 + $0xe90] sm:$0xff]
        %v714 = vld [vmem:[%s200 + $0xe98] sm:$0xff]
        %v715 = vld [vmem:[%s200 + $0xea0] sm:$0xff]
        %v716 = vld [vmem:[%s200 + $0xea8] sm:$0xff]
        %v717 = vld [vmem:[%s200 + $0xeb0] sm:$0xff]
        %v718 = vld [vmem:[%s200 + $0xeb8] sm:$0xff]
        %v719 = vld [vmem:[%s200 + $0xec0] sm:$0xff]
        %v720 = vld [vmem:[%s200 + $0xec8] sm:$0xff]
        %v721 = vld [vmem:[%s200 + $0xed0] sm:$0xff]
        %v722 = vld [vmem:[%s200 + $0xed8] sm:$0xff]
        %v723 = vld [vmem:[%s200 + $0xee0] sm:$0xff]
        %v724 = vld [vmem:[%s200 + $0xee8] sm:$0xff]
        %v725 = vld [vmem:[%s200 + $0xef0] sm:$0xff]
        %v726 = vld [vmem:[%s200 + $0xef8] sm:$0xff]
        %v727 = vld [vmem:[%s200 + $0xf00] sm:$0xff]
        %v728 = vld [vmem:[%s200 + $0xf08] sm:$0xff]
        %v729 = vld [vmem:[%s200 + $0xf10] sm:$0xff]
        %v730 = vld [vmem:[%s200 + $0xf18] sm:$0xff]
        %v731 = vld [vmem:[%s200 + $0xf20] sm:$0xff]
        %v732 = vld [vmem:[%s200 + $0xf28] sm:$0xff]
        %v733 = vld [vmem:[%s200 + $0xf30] sm:$0xff]
        %v734 = vld [vmem:[%s200 + $0xf38] sm:$0xff]
        %v735 = vld [vmem:[%s200 + $0xf40] sm:$0xff]
        %v736 = vld [vmem:[%s200 + $0xf48] sm:$0xff]
        %v737 = vld [vmem:[%s200 + $0xf50] sm:$0xff]
        %v738 = vld [vmem:[%s200 + $0xf58] sm:$0xff]
        %v739 = vld [vmem:[%s200 + $0xf60] sm:$0xff]
        %v740 = vld [vmem:[%s200 + $0xf68] sm:$0xff]
        %v741 = vld [vmem:[%s200 + $0xf70] sm:$0xff]
        %v742 = vld [vmem:[%s200 + $0xf78] sm:$0xff]
        %v743 = vld [vmem:[%s200 + $0xf80] sm:$0xff]
        %v744 = vld [vmem:[%s200 + $0xf88] sm:$0xff]
        %v745 = vld [vmem:[%s200 + $0xf90] sm:$0xff]
        %v746 = vld [vmem:[%s200 + $0xf98] sm:$0xff]
        %v747 = vld [vmem:[%s200 + $0xfa0] sm:$0xff]
        %v748 = vld [vmem:[%s200 + $0xfa8] sm:$0xff]
        %v749 = vld [vmem:[%s200 + $0xfb0] sm:$0xff]
        %v750 = vld [vmem:[%s200 + $0xfb8] sm:$0xff]
        %v751 = vld [vmem:[%s200 + $0xfc0] sm:$0xff]
        %v752 = vld [vmem:[%s200 + $0xfc8] sm:$0xff]
        %v753 = vld [vmem:[%s200 + $0xfd0] sm:$0xff]
        %v754 = vld [vmem:[%s200 + $0xfd8] sm:$0xff]
        %v755 = vld [vmem:[%s200 + $0xfe0] sm:$0xff]
        %v756 = vld [vmem:[%s200 + $0xfe8] sm:$0xff]
        %v757 = vld [vmem:[%s200 + $0xff0] sm:$0xff]
        %v758 = vld [vmem:[%s200 + $0xff8] sm:$0xff]
        %v759 = vld [vmem:[%s200 + $0x1000] sm:$0xff]
        %v760 = vld [vmem:[%s200 + $0x1008] sm:$0xff]
        %v761 = vld [vmem:[%s200 + $0x1010] sm:$0xff]
        %v762 = vld [vmem:[%s200 + $0x1018] sm:$0xff]
        %v763 = vld [vmem:[%s200 + $0x1020] sm:$0xff]
        %v764 = vld [vmem:[%s200 + $0x1028] sm:$0xff]
        %v765 = vld [vmem:[%s200 + $0x1030] sm:$0xff]
        %v766 = vld [vmem:[%s200 + $0x1038] sm:$0xff]
        %v767 = vld [vmem:[%s200 + $0x1040] sm:$0xff]
        %v768 = vld [vmem:[%s200 + $0x1048] sm:$0xff]
        %v769 = vld [vmem:[%s200 + $0x1050] sm:$0xff]
        %v770 = vld [vmem:[%s200 + $0x1058] sm:$0xff]
        %v771 = vld [vmem:[%s200 + $0x1060] sm:$0xff]
        %v772 = vld [vmem:[%s200 + $0x1068] sm:$0xff]
        %v773 = vld [vmem:[%s200 + $0x1070] sm:$0xff]
        %v774 = vld [vmem:[%s200 + $0x1078] sm:$0xff]
        %v775 = vld [vmem:[%s200 + $0x1080] sm:$0xff]
        %v776 = vld [vmem:[%s200 + $0x1088] sm:$0xff]
        %v777 = vld [vmem:[%s200 + $0x1090] sm:$0xff]
        %v778 = vld [vmem:[%s200 + $0x1098] sm:$0xff]
        %v779 = vld [vmem:[%s200 + $0x10a0] sm:$0xff]
        %v780 = vld [vmem:[%s200 + $0x10a8] sm:$0xff]
        %v781 = vld [vmem:[%s200 + $0x10b0] sm:$0xff]
        %v782 = vld [vmem:[%s200 + $0x10b8] sm:$0xff]
        %v783 = vld [vmem:[%s200 + $0x10c0] sm:$0xff]
        %v784 = vld [vmem:[%s200 + $0x10c8] sm:$0xff]
        %v785 = vld [vmem:[%s200 + $0x10d0] sm:$0xff]
        %v786 = vld [vmem:[%s200 + $0x10d8] sm:$0xff]
        %v787 = vld [vmem:[%s200 + $0x10e0] sm:$0xff]
        %v788 = vld [vmem:[%s200 + $0x10e8] sm:$0xff]
        %v789 = vld [vmem:[%s200 + $0x10f0] sm:$0xff]
        %v790 = vld [vmem:[%s200 + $0x10f8] sm:$0xff]
        %v791 = vld [vmem:[%s200 + $0x1100] sm:$0xff]
        %v792 = vld [vmem:[%s200 + $0x1108] sm:$0xff]
        %v793 = vld [vmem:[%s200 + $0x1110] sm:$0xff]
        %v794 = vld [vmem:[%s200 + $0x1118] sm:$0xff]
        %v795 = vld [vmem:[%s200 + $0x1120] sm:$0xff]
        %v796 = vld [vmem:[%s200 + $0x1128] sm:$0xff]
        %v797 = vld [vmem:[%s200 + $0x1130] sm:$0xff]
        %v798 = vld [vmem:[%s200 + $0x1138] sm:$0xff]
        %v799 = vld [vmem:[%s200 + $0x1140] sm:$0xff]
        %v800 = vld [vmem:[%s200 + $0x1148] sm:$0xff]
        %v801 = vld [vmem:[%s200 + $0x1150] sm:$0xff]
        %v802 = vld [vmem:[%s200 + $0x1158] sm:$0xff]
        %v803 = vld [vmem:[%s200 + $0x1160] sm:$0xff]
        %v804 = vld [vmem:[%s200 + $0x1168] sm:$0xff]
        %v805 = vld [vmem:[%s200 + $0x1170] sm:$0xff]
        %v806 = vld [vmem:[%s200 + $0x1178] sm:$0xff]
        %v807 = vld [vmem:[%s200 + $0x1180] sm:$0xff]
        %v808 = vld [vmem:[%s200 + $0x1188] sm:$0xff]
        %v809 = vld [vmem:[%s200 + $0x1190] sm:$0xff]
        %v810 = vld [vmem:[%s200 + $0x1198] sm:$0xff]
        %v811 = vld [vmem:[%s200 + $0x11a0] sm:$0xff]
        %v812 = vld [vmem:[%s200 + $0x11a8] sm:$0xff]
        %v813 = vld [vmem:[%s200 + $0x11b0] sm:$0xff]
        %v814 = vld [vmem:[%s200 + $0x11b8] sm:$0xff]
        %v815 = vld [vmem:[%s200 + $0x11c0] sm:$0xff]
        %v816 = vld [vmem:[%s200 + $0x11c8] sm:$0xff]
        %v817 = vld [vmem:[%s200 + $0x11d0] sm:$0xff]
        %v818 = vld [vmem:[%s200 + $0x11d8] sm:$0xff]
        %v819 = vld [vmem:[%s200 + $0x11e0] sm:$0xff]
        %v820 = vld [vmem:[%s200 + $0x11e8] sm:$0xff]
        %v821 = vld [vmem:[%s200 + $0x11f0] sm:$0xff]
        %v822 = vld [vmem:[%s200 + $0x11f8] sm:$0xff]
        %v823 = vld [vmem:[%s200 + $0x1200] sm:$0xff]
        %v824 = vld [vmem:[%s200 + $0x1208] sm:$0xff]
        %v825 = vld [vmem:[%s200 + $0x1210] sm:$0xff]
        %v826 = vld [vmem:[%s200 + $0x1218] sm:$0xff]
        %v827 = vld [vmem:[%s200 + $0x1220] sm:$0xff]
        %v828 = vld [vmem:[%s200 + $0x1228] sm:$0xff]
        %v829 = vld [vmem:[%s200 + $0x1230] sm:$0xff]
        %v830 = vld [vmem:[%s200 + $0x1238] sm:$0xff]
        %v831 = vld [vmem:[%s200 + $0x1240] sm:$0xff]
        %v832 = vld [vmem:[%s200 + $0x1248] sm:$0xff]
        %v833 = vld [vmem:[%s200 + $0x1250] sm:$0xff]
        %v834 = vld [vmem:[%s200 + $0x1258] sm:$0xff]
        %v835 = vld [vmem:[%s200 + $0x1260] sm:$0xff]
        %v836 = vld [vmem:[%s200 + $0x1268] sm:$0xff]
        %v837 = vld [vmem:[%s200 + $0x1270] sm:$0xff]
        %v838 = vld [vmem:[%s200 + $0x1278] sm:$0xff]
        %v839 = vld [vmem:[%s200 + $0x1280] sm:$0xff]
        %v840 = vld [vmem:[%s200 + $0x1288] sm:$0xff]
        %v841 = vld [vmem:[%s200 + $0x1290] sm:$0xff]
        %v842 = vld [vmem:[%s200 + $0x1298] sm:$0xff]
        %v843 = vld [vmem:[%s200 + $0x12a0] sm:$0xff]
        %v844 = vld [vmem:[%s200 + $0x12a8] sm:$0xff]
        %v845 = vld [vmem:[%s200 + $0x12b0] sm:$0xff]
        %v846 = vld [vmem:[%s200 + $0x12b8] sm:$0xff]
        %v847 = vld [vmem:[%s200 + $0x12c0] sm:$0xff]
        %v848 = vld [vmem:[%s200 + $0x12c8] sm:$0xff]
        %v849 = vld [vmem:[%s200 + $0x12d0] sm:$0xff]
        %v850 = vld [vmem:[%s200 + $0x12d8] sm:$0xff]
        %v851 = vld [vmem:[%s200 + $0x12e0] sm:$0xff]
        %v852 = vld [vmem:[%s200 + $0x12e8] sm:$0xff]
        %v853 = vld [vmem:[%s200 + $0x12f0] sm:$0xff]
        %v854 = vld [vmem:[%s200 + $0x12f8] sm:$0xff]
        %v855 = vld [vmem:[%s200 + $0x1300] sm:$0xff]
        %v856 = vld [vmem:[%s200 + $0x1308] sm:$0xff]
        %v857 = vld [vmem:[%s200 + $0x1310] sm:$0xff]
        %v858 = vld [vmem:[%s200 + $0x1318] sm:$0xff]
        %v859 = vld [vmem:[%s200 + $0x1320] sm:$0xff]
        %v860 = vld [vmem:[%s200 + $0x1328] sm:$0xff]
        %v861 = vld [vmem:[%s200 + $0x1330] sm:$0xff]
        %v862 = vld [vmem:[%s200 + $0x1338] sm:$0xff]
        %v863 = vld [vmem:[%s200 + $0x1340] sm:$0xff]
        %v864 = vld [vmem:[%s200 + $0x1348] sm:$0xff]
        %v865 = vld [vmem:[%s200 + $0x1350] sm:$0xff]
        %v866 = vld [vmem:[%s200 + $0x1358] sm:$0xff]
        %v867 = vld [vmem:[%s200 + $0x1360] sm:$0xff]
        %v868 = vld [vmem:[%s200 + $0x1368] sm:$0xff]
        %v869 = vld [vmem:[%s200 + $0x1370] sm:$0xff]
        %v870 = vld [vmem:[%s200 + $0x1378] sm:$0xff]
        %v871 = vld [vmem:[%s200 + $0x1380] sm:$0xff]
        %v872 = vld [vmem:[%s200 + $0x1388] sm:$0xff]
        %v873 = vld [vmem:[%s200 + $0x1390] sm:$0xff]
        %v874 = vld [vmem:[%s200 + $0x1398] sm:$0xff]
        %v875 = vld [vmem:[%s200 + $0x13a0] sm:$0xff]
        %v876 = vld [vmem:[%s200 + $0x13a8] sm:$0xff]
        %v877 = vld [vmem:[%s200 + $0x13b0] sm:$0xff]
        %v878 = vld [vmem:[%s200 + $0x13b8] sm:$0xff]
        %v879 = vld [vmem:[%s200 + $0x13c0] sm:$0xff]
        %v880 = vld [vmem:[%s200 + $0x13c8] sm:$0xff]
        %v881 = vld [vmem:[%s200 + $0x13d0] sm:$0xff]
        %v882 = vld [vmem:[%s200 + $0x13d8] sm:$0xff]
        %v883 = vld [vmem:[%s200 + $0x13e0] sm:$0xff]
        %v884 = vld [vmem:[%s200 + $0x13e8] sm:$0xff]
        %v885 = vld [vmem:[%s200 + $0x13f0] sm:$0xff]
        %v886 = vld [vmem:[%s200 + $0x13f8] sm:$0xff]
        %v887 = vld [vmem:[%s200 + $0x1400] sm:$0xff]
        %v888 = vld [vmem:[%s200 + $0x1408] sm:$0xff]
        %v889 = vld [vmem:[%s200 + $0x1410] sm:$0xff]
        %v890 = vld [vmem:[%s200 + $0x1418] sm:$0xff]
        %v891 = vld [vmem:[%s200 + $0x1420] sm:$0xff]
        %v892 = vld [vmem:[%s200 + $0x1428] sm:$0xff]
        %v893 = vld [vmem:[%s200 + $0x1430] sm:$0xff]
        %v894 = vld [vmem:[%s200 + $0x1438] sm:$0xff]
        %v895 = vld [vmem:[%s200 + $0x1440] sm:$0xff]
        %v896 = vld [vmem:[%s200 + $0x1448] sm:$0xff]
        %v897 = vld [vmem:[%s200 + $0x1450] sm:$0xff]
        %v898 = vld [vmem:[%s200 + $0x1458] sm:$0xff]
        %v899 = vld [vmem:[%s200 + $0x1460] sm:$0xff]
        %v900 = vld [vmem:[%s200 + $0x1468] sm:$0xff]
        %v901 = vld [vmem:[%s200 + $0x1470] sm:$0xff]
        %v902 = vld [vmem:[%s200 + $0x1478] sm:$0xff]
        %v903 = vld [vmem:[%s200 + $0x1480] sm:$0xff]
        %v904 = vld [vmem:[%s200 + $0x1488] sm:$0xff]
        %v905 = vld [vmem:[%s200 + $0x1490] sm:$0xff]
        %v906 = vld [vmem:[%s200 + $0x1498] sm:$0xff]
        %v907 = vld [vmem:[%s200 + $0x14a0] sm:$0xff]
        %v908 = vld [vmem:[%s200 + $0x14a8] sm:$0xff]
        %v909 = vld [vmem:[%s200 + $0x14b0] sm:$0xff]
        %v910 = vld [vmem:[%s200 + $0x14b8] sm:$0xff]
        %v911 = vld [vmem:[%s200 + $0x14c0] sm:$0xff]
        %v912 = vld [vmem:[%s200 + $0x14c8] sm:$0xff]
        %v913 = vld [vmem:[%s200 + $0x14d0] sm:$0xff]
        %v914 = vld [vmem:[%s200 + $0x14d8] sm:$0xff]
        %v915 = vld [vmem:[%s200 + $0x14e0] sm:$0xff]
        %v916 = vld [vmem:[%s200 + $0x14e8] sm:$0xff]
        %v917 = vld [vmem:[%s200 + $0x14f0] sm:$0xff]
        %v918 = vld [vmem:[%s200 + $0x14f8] sm:$0xff]
        %v919 = vld [vmem:[%s200 + $0x1500] sm:$0xff]
        %v920 = vld [vmem:[%s200 + $0x1508] sm:$0xff]
        %v921 = vld [vmem:[%s200 + $0x1510] sm:$0xff]
        %v922 = vld [vmem:[%s200 + $0x1518] sm:$0xff]
        %v923 = vld [vmem:[%s200 + $0x1520] sm:$0xff]
        %v924 = vld [vmem:[%s200 + $0x1528] sm:$0xff]
        %v925 = vld [vmem:[%s200 + $0x1530] sm:$0xff]
        %v926 = vld [vmem:[%s200 + $0x1538] sm:$0xff]
        %v927 = vld [vmem:[%s200 + $0x1540] sm:$0xff]
        %v928 = vld [vmem:[%s200 + $0x1548] sm:$0xff]
        %v929 = vld [vmem:[%s200 + $0x1550] sm:$0xff]
        %v930 = vld [vmem:[%s200 + $0x1558] sm:$0xff]
        %v931 = vld [vmem:[%s200 + $0x1560] sm:$0xff]
        %v932 = vld [vmem:[%s200 + $0x1568] sm:$0xff]
        %v933 = vld [vmem:[%s200 + $0x1570] sm:$0xff]
        %v934 = vld [vmem:[%s200 + $0x1578] sm:$0xff]
        %v935 = vld [vmem:[%s200 + $0x1580] sm:$0xff]
        %v936 = vld [vmem:[%s200 + $0x1588] sm:$0xff]
        %v937 = vld [vmem:[%s200 + $0x1590] sm:$0xff]
        %v938 = vld [vmem:[%s200 + $0x1598] sm:$0xff]
        %v939 = vld [vmem:[%s200 + $0x15a0] sm:$0xff]
        %v940 = vld [vmem:[%s200 + $0x15a8] sm:$0xff]
        %v941 = vld [vmem:[%s200 + $0x15b0] sm:$0xff]
        %v942 = vld [vmem:[%s200 + $0x15b8] sm:$0xff]
        %v943 = vld [vmem:[%s200 + $0x15c0] sm:$0xff]
        %v944 = vld [vmem:[%s200 + $0x15c8] sm:$0xff]
        %v945 = vld [vmem:[%s200 + $0x15d0] sm:$0xff]
        %v946 = vld [vmem:[%s200 + $0x15d8] sm:$0xff]
        %v947 = vld [vmem:[%s200 + $0x15e0] sm:$0xff]
        %v948 = vld [vmem:[%s200 + $0x15e8] sm:$0xff]
        %v949 = vld [vmem:[%s200 + $0x15f0] sm:$0xff]
        %v950 = vld [vmem:[%s200 + $0x15f8] sm:$0xff]
        %v951 = vld [vmem:[%s200 + $0x1600] sm:$0xff]
        %v952 = vld [vmem:[%s200 + $0x1608] sm:$0xff]
        %v953 = vld [vmem:[%s200 + $0x1610] sm:$0xff]
        %v954 = vld [vmem:[%s200 + $0x1618] sm:$0xff]
        %v955 = vld [vmem:[%s200 + $0x1620] sm:$0xff]
        %v956 = vld [vmem:[%s200 + $0x1628] sm:$0xff]
        %v957 = vld [vmem:[%s200 + $0x1630] sm:$0xff]
        %v958 = vld [vmem:[%s200 + $0x1638] sm:$0xff]
        %v959 = vld [vmem:[%s200 + $0x1640] sm:$0xff]
        %v960 = vld [vmem:[%s200 + $0x1648] sm:$0xff]
        %v961 = vld [vmem:[%s200 + $0x1650] sm:$0xff]
        %v962 = vld [vmem:[%s200 + $0x1658] sm:$0xff]
        %v963 = vld [vmem:[%s200 + $0x1660] sm:$0xff]
        %v964 = vld [vmem:[%s200 + $0x1668] sm:$0xff]
        %v965 = vld [vmem:[%s200 + $0x1670] sm:$0xff]
        %v966 = vld [vmem:[%s200 + $0x1678] sm:$0xff]
        %v967 = vld [vmem:[%s200 + $0x1680] sm:$0xff]
        %v968 = vld [vmem:[%s200 + $0x1688] sm:$0xff]
        %v969 = vld [vmem:[%s200 + $0x1690] sm:$0xff]
        %v970 = vld [vmem:[%s200 + $0x1698] sm:$0xff]
        %v971 = vld [vmem:[%s200 + $0x16a0] sm:$0xff]
        %v972 = vld [vmem:[%s200 + $0x16a8] sm:$0xff]
        %v973 = vld [vmem:[%s200 + $0x16b0] sm:$0xff]
        %v974 = vld [vmem:[%s200 + $0x16b8] sm:$0xff]
        %v975 = vld [vmem:[%s200 + $0x16c0] sm:$0xff]
        %v976 = vld [vmem:[%s200 + $0x16c8] sm:$0xff]
        %v977 = vld [vmem:[%s200 + $0x16d0] sm:$0xff]
        %v978 = vld [vmem:[%s200 + $0x16d8] sm:$0xff]
        %v979 = vld [vmem:[%s200 + $0x16e0] sm:$0xff]
        %v980 = vld [vmem:[%s200 + $0x16e8] sm:$0xff]
        %v981 = vld [vmem:[%s200 + $0x16f0] sm:$0xff]
        %v982 = vld [vmem:[%s200 + $0x16f8] sm:$0xff]
        %v983 = vld [vmem:[%s200 + $0x1700] sm:$0xff]
        %v984 = vld [vmem:[%s200 + $0x1708] sm:$0xff]
        %v985 = vld [vmem:[%s200 + $0x1710] sm:$0xff]
        %v986 = vld [vmem:[%s200 + $0x1718] sm:$0xff]
        %v987 = vld [vmem:[%s200 + $0x1720] sm:$0xff]
        %v988 = vld [vmem:[%s200 + $0x1728] sm:$0xff]
        %v989 = vld [vmem:[%s200 + $0x1730] sm:$0xff]
        %v990 = vld [vmem:[%s200 + $0x1738] sm:$0xff]
        %v991 = vld [vmem:[%s200 + $0x1740] sm:$0xff]
        %v992 = vld [vmem:[%s200 + $0x1748] sm:$0xff]
        %v993 = vld [vmem:[%s200 + $0x1750] sm:$0xff]
        %v994 = vld [vmem:[%s200 + $0x1758] sm:$0xff]
        %v995 = vld [vmem:[%s200 + $0x1760] sm:$0xff]
        %v996 = vld [vmem:[%s200 + $0x1768] sm:$0xff]
        %v997 = vld [vmem:[%s200 + $0x1770] sm:$0xff]
        %v998 = vld [vmem:[%s200 + $0x1778] sm:$0xff]
        %v999 = vld [vmem:[%s200 + $0x1780] sm:$0xff]
        %v1000 = vld [vmem:[%s200 + $0x1788] sm:$0xff]
        %v1001 = vld [vmem:[%s200 + $0x1790] sm:$0xff]
        %v1002 = vld [vmem:[%s200 + $0x1798] sm:$0xff]
        %v1003 = vld [vmem:[%s200 + $0x17a0] sm:$0xff]
        %v1004 = vld [vmem:[%s200 + $0x17a8] sm:$0xff]
        %v1005 = vld [vmem:[%s200 + $0x17b0] sm:$0xff]
        %v1006 = vld [vmem:[%s200 + $0x17b8] sm:$0xff]
        %v1007 = vld [vmem:[%s200 + $0x17c0] sm:$0xff]
        %v1008 = vld [vmem:[%s200 + $0x17c8] sm:$0xff]
        %v1009 = vld [vmem:[%s200 + $0x17d0] sm:$0xff]
        %v1010 = vld [vmem:[%s200 + $0x17d8] sm:$0xff]
        %v1011 = vld [vmem:[%s200 + $0x17e0] sm:$0xff]
        %v1012 = vld [vmem:[%s200 + $0x17e8] sm:$0xff]
        %v1013 = vld [vmem:[%s200 + $0x17f0] sm:$0xff]
        %v1014 = vld [vmem:[%s200 + $0x17f8] sm:$0xff]
        %v1015 = vld [vmem:[%s200 + $0x1800] sm:$0xff]
        %v1016 = vld [vmem:[%s200 + $0x1808] sm:$0xff]
        %v1017 = vld [vmem:[%s200 + $0x1810] sm:$0xff]
        %v1018 = vld [vmem:[%s200 + $0x1818] sm:$0xff]
        %v1019 = vld [vmem:[%s200 + $0x1820] sm:$0xff]
        %v1020 = vld [vmem:[%s200 + $0x1828] sm:$0xff]
        %v1021 = vld [vmem:[%s200 + $0x1830] sm:$0xff]
        %v1022 = vld [vmem:[%s200 + $0x1838] sm:$0xff]
        %v1023 = vld [vmem:[%s200 + $0x1840] sm:$0xff]
        %v1024 = vld [vmem:[%s200 + $0x1848] sm:$0xff]
        %v1025 = vld [vmem:[%s200 + $0x1850] sm:$0xff]
        %v1026 = vld [vmem:[%s200 + $0x1858] sm:$0xff]
        %v1027 = vld [vmem:[%s200 + $0x1860] sm:$0xff]
        %v1028 = vld [vmem:[%s200 + $0x1868] sm:$0xff]
        %v1029 = vld [vmem:[%s200 + $0x1870] sm:$0xff]
        %v1030 = vld [vmem:[%s200 + $0x1878] sm:$0xff]
        %v1031 = vld [vmem:[%s200 + $0x1880] sm:$0xff]
        %v1032 = vld [vmem:[%s200 + $0x1888] sm:$0xff]
        %v1033 = vld [vmem:[%s200 + $0x1890] sm:$0xff]
        %v1034 = vld [vmem:[%s200 + $0x1898] sm:$0xff]
        %v1035 = vld [vmem:[%s200 + $0x18a0] sm:$0xff]
        %v1036 = vld [vmem:[%s200 + $0x18a8] sm:$0xff]
        %v1037 = vld [vmem:[%s200 + $0x18b0] sm:$0xff]
        %v1038 = vld [vmem:[%s200 + $0x18b8] sm:$0xff]
        %v1039 = vld [vmem:[%s200 + $0x18c0] sm:$0xff]
        %v1040 = vld [vmem:[%s200 + $0x18c8] sm:$0xff]
        %v1041 = vld [vmem:[%s200 + $0x18d0] sm:$0xff]
        %v1042 = vld [vmem:[%s200 + $0x18d8] sm:$0xff]
        %v1043 = vld [vmem:[%s200 + $0x18e0] sm:$0xff]
        %v1044 = vld [vmem:[%s200 + $0x18e8] sm:$0xff]
        %v1045 = vld [vmem:[%s200 + $0x18f0] sm:$0xff]
        %v1046 = vld [vmem:[%s200 + $0x18f8] sm:$0xff]
        %v1047 = vld [vmem:[%s200 + $0x1900] sm:$0xff]
        %v1048 = vld [vmem:[%s200 + $0x1908] sm:$0xff]
        %v1049 = vld [vmem:[%s200 + $0x1910] sm:$0xff]
        %v1050 = vld [vmem:[%s200 + $0x1918] sm:$0xff]
        %v1051 = vld [vmem:[%s200 + $0x1920] sm:$0xff]
        %v1052 = vld [vmem:[%s200 + $0x1928] sm:$0xff]
        %v1053 = vld [vmem:[%s200 + $0x1930] sm:$0xff]
        %v1054 = vld [vmem:[%s200 + $0x1938] sm:$0xff]
        %v1055 = vld [vmem:[%s200 + $0x1940] sm:$0xff]
        %v1056 = vld [vmem:[%s200 + $0x1948] sm:$0xff]
        %v1057 = vld [vmem:[%s200 + $0x1950] sm:$0xff]
        %v1058 = vld [vmem:[%s200 + $0x1958] sm:$0xff]
        %v1059 = vld [vmem:[%s200 + $0x1960] sm:$0xff]
        %v1060 = vld [vmem:[%s200 + $0x1968] sm:$0xff]
        %v1061 = vld [vmem:[%s200 + $0x1970] sm:$0xff]
        %v1062 = vld [vmem:[%s200 + $0x1978] sm:$0xff]
        %v1063 = vld [vmem:[%s200 + $0x1980] sm:$0xff]
        %v1064 = vld [vmem:[%s200 + $0x1988] sm:$0xff]
        %v1065 = vld [vmem:[%s200 + $0x1990] sm:$0xff]
        %v1066 = vld [vmem:[%s200 + $0x1998] sm:$0xff]
        %v1067 = vld [vmem:[%s200 + $0x19a0] sm:$0xff]
        %v1068 = vld [vmem:[%s200 + $0x19a8] sm:$0xff]
        %v1069 = vld [vmem:[%s200 + $0x19b0] sm:$0xff]
        %v1070 = vld [vmem:[%s200 + $0x19b8] sm:$0xff]
        %v1071 = vld [vmem:[%s200 + $0x19c0] sm:$0xff]
        %v1072 = vld [vmem:[%s200 + $0x19c8] sm:$0xff]
        %v1073 = vld [vmem:[%s200 + $0x19d0] sm:$0xff]
        %v1074 = vld [vmem:[%s200 + $0x19d8] sm:$0xff]
        %v1075 = vld [vmem:[%s200 + $0x19e0] sm:$0xff]
        %v1076 = vld [vmem:[%s200 + $0x19e8] sm:$0xff]
        %v1077 = vld [vmem:[%s200 + $0x19f0] sm:$0xff]
        %v1078 = vld [vmem:[%s200 + $0x19f8] sm:$0xff]
        %v1079 = vld [vmem:[%s200 + $0x1a00] sm:$0xff]
        %v1080 = vld [vmem:[%s200 + $0x1a08] sm:$0xff]
        %v1081 = vld [vmem:[%s200 + $0x1a10] sm:$0xff]
        %v1082 = vld [vmem:[%s200 + $0x1a18] sm:$0xff]
        %v1083 = vld [vmem:[%s200 + $0x1a20] sm:$0xff]
        %v1084 = vld [vmem:[%s200 + $0x1a28] sm:$0xff]
        %v1085 = vld [vmem:[%s200 + $0x1a30] sm:$0xff]
        %v1086 = vld [vmem:[%s200 + $0x1a38] sm:$0xff]
        %v1087 = vld [vmem:[%s200 + $0x1a40] sm:$0xff]
        %v1088 = vld [vmem:[%s200 + $0x1a48] sm:$0xff]
        %v1089 = vld [vmem:[%s200 + $0x1a50] sm:$0xff]
        %v1090 = vld [vmem:[%s200 + $0x1a58] sm:$0xff]
        %v1091 = vld [vmem:[%s200 + $0x1a60] sm:$0xff]
        %v1092 = vld [vmem:[%s200 + $0x1a68] sm:$0xff]
        %v1093 = vld [vmem:[%s200 + $0x1a70] sm:$0xff]
        %v1094 = vld [vmem:[%s200 + $0x1a78] sm:$0xff]
        %v1095 = vld [vmem:[%s200 + $0x1a80] sm:$0xff]
        %v1096 = vld [vmem:[%s200 + $0x1a88] sm:$0xff]
        %v1097 = vld [vmem:[%s200 + $0x1a90] sm:$0xff]
        %v1098 = vld [vmem:[%s200 + $0x1a98] sm:$0xff]
        %v1099 = vld [vmem:[%s200 + $0x1aa0] sm:$0xff]
        %v1100 = vld [vmem:[%s200 + $0x1aa8] sm:$0xff]
        %v1101 = vld [vmem:[%s200 + $0x1ab0] sm:$0xff]
        %v1102 = vld [vmem:[%s200 + $0x1ab8] sm:$0xff]
        %v1103 = vld [vmem:[%s200 + $0x1ac0] sm:$0xff]
        %v1104 = vld [vmem:[%s200 + $0x1ac8] sm:$0xff]
        %v1105 = vld [vmem:[%s200 + $0x1ad0] sm:$0xff]
        %v1106 = vld [vmem:[%s200 + $0x1ad8] sm:$0xff]
        %v1107 = vld [vmem:[%s200 + $0x1ae0] sm:$0xff]
        %v1108 = vld [vmem:[%s200 + $0x1ae8] sm:$0xff]
        %v1109 = vld [vmem:[%s200 + $0x1af0] sm:$0xff]
        %v1110 = vld [vmem:[%s200 + $0x1af8] sm:$0xff]
        %v1111 = vld [vmem:[%s200 + $0x1b00] sm:$0xff]
        %v1112 = vld [vmem:[%s200 + $0x1b08] sm:$0xff]
        %v1113 = vld [vmem:[%s200 + $0x1b10] sm:$0xff]
        %v1114 = vld [vmem:[%s200 + $0x1b18] sm:$0xff]
        %v1115 = vld [vmem:[%s200 + $0x1b20] sm:$0xff]
        %v1116 = vld [vmem:[%s200 + $0x1b28] sm:$0xff]
        %v1117 = vld [vmem:[%s200 + $0x1b30] sm:$0xff]
        %v1118 = vld [vmem:[%s200 + $0x1b38] sm:$0xff]
        %v1119 = vld [vmem:[%s200 + $0x1b40] sm:$0xff]
        %v1120 = vld [vmem:[%s200 + $0x1b48] sm:$0xff]
        %v1121 = vld [vmem:[%s200 + $0x1b50] sm:$0xff]
        %v1122 = vld [vmem:[%s200 + $0x1b58] sm:$0xff]
        %v1123 = vld [vmem:[%s200 + $0x1b60] sm:$0xff]
        %v1124 = vld [vmem:[%s200 + $0x1b68] sm:$0xff]
        %v1125 = vld [vmem:[%s200 + $0x1b70] sm:$0xff]
        %v1126 = vld [vmem:[%s200 + $0x1b78] sm:$0xff]
        %v1127 = vld [vmem:[%s200 + $0x1b80] sm:$0xff]
        %v1128 = vld [vmem:[%s200 + $0x1b88] sm:$0xff]
        %v1129 = vld [vmem:[%s200 + $0x1b90] sm:$0xff]
        %v1130 = vld [vmem:[%s200 + $0x1b98] sm:$0xff]
        %v1131 = vld [vmem:[%s200 + $0x1ba0] sm:$0xff]
        %v1132 = vld [vmem:[%s200 + $0x1ba8] sm:$0xff]
        %v1133 = vld [vmem:[%s200 + $0x1bb0] sm:$0xff]
        %v1134 = vld [vmem:[%s200 + $0x1bb8] sm:$0xff]
        %v1135 = vld [vmem:[%s200 + $0x1bc0] sm:$0xff]
        %v1136 = vld [vmem:[%s200 + $0x1bc8] sm:$0xff]
        %v1137 = vld [vmem:[%s200 + $0x1bd0] sm:$0xff]
        %v1138 = vld [vmem:[%s200 + $0x1bd8] sm:$0xff]
        %v1139 = vld [vmem:[%s200 + $0x1be0] sm:$0xff]
        %v1140 = vld [vmem:[%s200 + $0x1be8] sm:$0xff]
        %v1141 = vld [vmem:[%s200 + $0x1bf0] sm:$0xff]
        %v1142 = vld [vmem:[%s200 + $0x1bf8] sm:$0xff]
        %v1143 = vld [vmem:[%s200 + $0x1c00] sm:$0xff]
        %v1144 = vld [vmem:[%s200 + $0x1c08] sm:$0xff]
        %v1145 = vld [vmem:[%s200 + $0x1c10] sm:$0xff]
        %v1146 = vld [vmem:[%s200 + $0x1c18] sm:$0xff]
        %v1147 = vld [vmem:[%s200 + $0x1c20] sm:$0xff]
        %v1148 = vld [vmem:[%s200 + $0x1c28] sm:$0xff]
        %v1149 = vld [vmem:[%s200 + $0x1c30] sm:$0xff]
        %v1150 = vld [vmem:[%s200 + $0x1c38] sm:$0xff]
        %v1151 = vld [vmem:[%s200 + $0x1c40] sm:$0xff]
        %v1152 = vld [vmem:[%s200 + $0x1c48] sm:$0xff]
        %v1153 = vld [vmem:[%s200 + $0x1c50] sm:$0xff]
        %v1154 = vld [vmem:[%s200 + $0x1c58] sm:$0xff]
        %v1155 = vld [vmem:[%s200 + $0x1c60] sm:$0xff]
        %v1156 = vld [vmem:[%s200 + $0x1c68] sm:$0xff]
        %v1157 = vld [vmem:[%s200 + $0x1c70] sm:$0xff]
        %v1158 = vld [vmem:[%s200 + $0x1c78] sm:$0xff]
        %v1159 = vld [vmem:[%s200 + $0x1c80] sm:$0xff]
        %v1160 = vld [vmem:[%s200 + $0x1c88] sm:$0xff]
        %v1161 = vld [vmem:[%s200 + $0x1c90] sm:$0xff]
        %v1162 = vld [vmem:[%s200 + $0x1c98] sm:$0xff]
        %v1163 = vld [vmem:[%s200 + $0x1ca0] sm:$0xff]
        %v1164 = vld [vmem:[%s200 + $0x1ca8] sm:$0xff]
        %v1165 = vld [vmem:[%s200 + $0x1cb0] sm:$0xff]
        %v1166 = vld [vmem:[%s200 + $0x1cb8] sm:$0xff]
        %v1167 = vld [vmem:[%s200 + $0x1cc0] sm:$0xff]
        %v1168 = vld [vmem:[%s200 + $0x1cc8] sm:$0xff]
        %v1169 = vld [vmem:[%s200 + $0x1cd0] sm:$0xff]
        %v1170 = vld [vmem:[%s200 + $0x1cd8] sm:$0xff]
        %v1171 = vld [vmem:[%s200 + $0x1ce0] sm:$0xff]
        %v1172 = vld [vmem:[%s200 + $0x1ce8] sm:$0xff]
        %v1173 = vld [vmem:[%s200 + $0x1cf0] sm:$0xff]
        %v1174 = vld [vmem:[%s200 + $0x1cf8] sm:$0xff]
        %v1175 = vld [vmem:[%s200 + $0x1d00] sm:$0xff]
        %v1176 = vld [vmem:[%s200 + $0x1d08] sm:$0xff]
        %v1177 = vld [vmem:[%s200 + $0x1d10] sm:$0xff]
        %v1178 = vld [vmem:[%s200 + $0x1d18] sm:$0xff]
        %v1179 = vld [vmem:[%s200 + $0x1d20] sm:$0xff]
        %v1180 = vld [vmem:[%s200 + $0x1d28] sm:$0xff]
        %v1181 = vld [vmem:[%s200 + $0x1d30] sm:$0xff]
        %v1182 = vld [vmem:[%s200 + $0x1d38] sm:$0xff]
        %v1183 = vld [vmem:[%s200 + $0x1d40] sm:$0xff]
        %v1184 = vld [vmem:[%s200 + $0x1d48] sm:$0xff]
        %v1185 = vld [vmem:[%s200 + $0x1d50] sm:$0xff]
        %v1186 = vld [vmem:[%s200 + $0x1d58] sm:$0xff]
        %v1187 = vld [vmem:[%s200 + $0x1d60] sm:$0xff]
        %v1188 = vld [vmem:[%s200 + $0x1d68] sm:$0xff]
        %v1189 = vld [vmem:[%s200 + $0x1d70] sm:$0xff]
        %v1190 = vld [vmem:[%s200 + $0x1d78] sm:$0xff]
        %v1191 = vld [vmem:[%s200 + $0x1d80] sm:$0xff]
        %v1192 = vld [vmem:[%s200 + $0x1d88] sm:$0xff]
        %v1193 = vld [vmem:[%s200 + $0x1d90] sm:$0xff]
        %v1194 = vld [vmem:[%s200 + $0x1d98] sm:$0xff]
        %v1195 = vld [vmem:[%s200 + $0x1da0] sm:$0xff]
        %v1196 = vld [vmem:[%s200 + $0x1da8] sm:$0xff]
        %v1197 = vld [vmem:[%s200 + $0x1db0] sm:$0xff]
        %v1198 = vld [vmem:[%s200 + $0x1db8] sm:$0xff]
        %v1199 = vld [vmem:[%s200 + $0x1dc0] sm:$0xff]
        %v1200 = vld [vmem:[%s200 + $0x1dc8] sm:$0xff]
        %v1201 = vld [vmem:[%s200 + $0x1dd0] sm:$0xff]
        %v1202 = vld [vmem:[%s200 + $0x1dd8] sm:$0xff]
        %v1203 = vld [vmem:[%s200 + $0x1de0] sm:$0xff]
        %v1204 = vld [vmem:[%s200 + $0x1de8] sm:$0xff]
        %v1205 = vld [vmem:[%s200 + $0x1df0] sm:$0xff]
        %v1206 = vld [vmem:[%s200 + $0x1df8] sm:$0xff]
        %v1207 = vld [vmem:[%s200 + $0x1e00] sm:$0xff]
        %v1208 = vld [vmem:[%s200 + $0x1e08] sm:$0xff]
        %v1209 = vld [vmem:[%s200 + $0x1e10] sm:$0xff]
        %v1210 = vld [vmem:[%s200 + $0x1e18] sm:$0xff]
        %v1211 = vld [vmem:[%s200 + $0x1e20] sm:$0xff]
        %v1212 = vld [vmem:[%s200 + $0x1e28] sm:$0xff]
        %v1213 = vld [vmem:[%s200 + $0x1e30] sm:$0xff]
        %v1214 = vld [vmem:[%s200 + $0x1e38] sm:$0xff]
        %v1215 = vld [vmem:[%s200 + $0x1e40] sm:$0xff]
        %v1216 = vld [vmem:[%s200 + $0x1e48] sm:$0xff]
        %v1217 = vld [vmem:[%s200 + $0x1e50] sm:$0xff]
        %v1218 = vld [vmem:[%s200 + $0x1e58] sm:$0xff]
        %v1219 = vld [vmem:[%s200 + $0x1e60] sm:$0xff]
        %v1220 = vld [vmem:[%s200 + $0x1e68] sm:$0xff]
        %v1221 = vld [vmem:[%s200 + $0x1e70] sm:$0xff]
        %v1222 = vld [vmem:[%s200 + $0x1e78] sm:$0xff]
        %v1223 = vld [vmem:[%s200 + $0x1e80] sm:$0xff]
        %v1224 = vld [vmem:[%s200 + $0x1e88] sm:$0xff]
        %v1225 = vld [vmem:[%s200 + $0x1e90] sm:$0xff]
        %v1226 = vld [vmem:[%s200 + $0x1e98] sm:$0xff]
        %v1227 = vld [vmem:[%s209] sm:$0xff]
        %v1228 = vld [vmem:[%s209 + $0x8] sm:$0x3]
        %v1231 = vlaneseq
        %v1232 = vshrl.u32 %v1231, 7
        %v1233 = vsub.s32 0, %v1232
        %v1234 = vrot.slane %v1227, %v1233
        %v1235 = vlaneseq
        %v1236 = vshrl.u32 %v1235, 7
        %v1237 = vsub.s32 1, %v1236
        %v1238 = vrot.slane %v1227, %v1237
        %v1239 = vlaneseq
        %v1240 = vshrl.u32 %v1239, 7
        %v1241 = vsub.s32 2, %v1240
        %v1242 = vrot.slane %v1227, %v1241
        %v1243 = vlaneseq
        %v1244 = vshrl.u32 %v1243, 7
        %v1245 = vsub.s32 3, %v1244
        %v1246 = vrot.slane %v1227, %v1245
        %v1247 = vlaneseq
        %v1248 = vshrl.u32 %v1247, 7
        %v1249 = vsub.s32 4, %v1248
        %v1250 = vrot.slane %v1227, %v1249
        %v1251 = vlaneseq
        %v1252 = vshrl.u32 %v1251, 7
        %v1253 = vsub.s32 5, %v1252
        %v1254 = vrot.slane %v1227, %v1253
        %v1255 = vlaneseq
        %v1256 = vshrl.u32 %v1255, 7
        %v1257 = vsub.s32 6, %v1256
        %v1258 = vrot.slane %v1227, %v1257
        %v1259 = vlaneseq
        %v1260 = vshrl.u32 %v1259, 7
        %v1261 = vsub.s32 7, %v1260
        %v1262 = vrot.slane %v1227, %v1261
        %v1263 = vlaneseq
        %v1264 = vshrl.u32 %v1263, 7
        %v1265 = vsub.s32 0, %v1264
        %v1266 = vrot.slane %v1228, %v1265
        %v1267 = vlaneseq
        %v1268 = vshrl.u32 %v1267, 7
        %v1269 = vsub.s32 1, %v1268
        %v1270 = vrot.slane %v1228, %v1269
        %vm1281 = vcmask 130048
        %v1283 = vsel %vm1281, %v246, 0
        %1285 = vmatprep.subr.mxu0 %v248
        %1286 = vmatpush1.msra.mxu0 %v247
        %1287 = vmatprep.subr.mxu0 %v258
        %1288 = vmatpush1.msra.mxu0 %v257
        %1289 = vmatprep.subr.mxu0 %v268
        %1290 = vmatpush1.msra.mxu0 %v267
        %1291 = vmatprep.subr.mxu0 %v278
        %1292 = vmatpush1.msra.mxu0 %v277
        %1293 = vmatprep.subr.mxu0 %v288
        %1294 = vmatpush1.msra.mxu0 %v287
        %1295 = vmatprep.subr.mxu0 %v298
        %1296 = vmatpush1.msra.mxu0 %v297
        %1297 = vmatprep.subr.mxu0 %v308
        %1298 = vmatpush1.msra.mxu0 %v307
        %1299 = vmatprep.subr.mxu0 %v318
        %1300 = vmatpush1.msra.mxu0 %v317
        %1301 = vmatprep.subr.mxu0 %v328
        %1302 = vmatpush1.msra.mxu0 %v327
        %1303 = vmatprep.subr.mxu0 %v338
        %1304 = vmatpush1.msra.mxu0 %v337
        %1305 = vmatprep.subr.mxu0 %v348
        %1306 = vmatpush1.msra.mxu0 %v347
        %1307 = vmatprep.subr.mxu0 %v358
        %1308 = vmatpush1.msra.mxu0 %v357
        %1309 = vmatprep.subr.mxu0 %v368
        %1310 = vmatpush1.msra.mxu0 %v367
        %1311 = vmatprep.subr.mxu0 %v378
        %1312 = vmatpush1.msra.mxu0 %v377
        %1313 = vmatprep.subr.mxu0 %v388
        %1314 = vmatpush1.msra.mxu0 %v387
        %1315 = vmatprep.subr.mxu0 %v398
        %1316 = vmatpush1.msra.mxu0 %v397
        %1317 = vmatprep.subr.mxu0 %v408
        %1318 = vmatpush1.msra.mxu0 %v407
        %1319 = vmatprep.subr.mxu0 %v418
        %1320 = vmatpush1.msra.mxu0 %v417
        %1321 = vmatprep.subr.mxu0 %v428
        %1322 = vmatpush1.msra.mxu0 %v427
        %1323 = vmatprep.subr.mxu0 %v438
        %1324 = vmatpush1.msra.mxu0 %v437
        %1325 = vmatprep.subr.mxu0 %v448
        %1326 = vmatpush1.msra.mxu0 %v447
        %1327 = vmatprep.subr.mxu0 %v458
        %1328 = vmatpush1.msra.mxu0 %v457
        %1329 = vmatprep.subr.mxu0 %v468
        %1330 = vmatpush1.msra.mxu0 %v467
        %1331 = vmatprep.subr.mxu0 %v478
        %1332 = vmatpush1.msra.mxu0 %v477
        %1333 = vmatprep.subr.mxu0 %v488
        %1334 = vmatpush1.msra.mxu0 %v487
        %1335 = vmatprep.subr.mxu0 %v498
        %1336 = vmatpush1.msra.mxu0 %v497
        %1337 = vmatprep.subr.mxu0 %v508
        %1338 = vmatpush1.msra.mxu0 %v507
        %1339 = vmatprep.subr.mxu0 %v518
        %1340 = vmatpush1.msra.mxu0 %v517
        %1341 = vmatprep.subr.mxu0 %v528
        %1342 = vmatpush1.msra.mxu0 %v527
        %1343 = vmatprep.subr.mxu0 %v538
        %1344 = vmatpush1.msra.mxu0 %v537
        %1345 = vmatprep.subr.mxu0 %v548
        %1346 = vmatpush1.msra.mxu0 %v547
        %1347 = vmatprep.subr.mxu0 %v558
        %1348 = vmatpush1.msra.mxu0 %v557
        %1349 = vmatprep.mubr.f32.mxu0 %v241
        %1350 = vmatmul.mubr.f32.gmra.mrb[0].mxu0 %v240
        %v1351 = vpop.f32.mrb[0].mxu0
        %v1352 = vadd.f32 %v1234, %v1351
        %v1353 = vpop.f32.mrb[0].mxu0
        %v1354 = vadd.f32 %v1238, %v1353
        %1355 = vdwg.mxu0
        %1356 = vmatprep.subr.mxu0 %v568
        %1357 = vmatpush1.msra.mxu0 %v567
        %1358 = vmatprep.subr.mxu0 %v578
        %1359 = vmatpush1.msra.mxu0 %v577
        %1360 = vmatprep.subr.mxu0 %v588
        %1361 = vmatpush1.msra.mxu0 %v587
        %1362 = vmatprep.subr.mxu0 %v598
        %1363 = vmatpush1.msra.mxu0 %v597
        %1364 = vmatprep.subr.mxu0 %v608
        %1365 = vmatpush1.msra.mxu0 %v607
        %1366 = vmatprep.subr.mxu0 %v618
        %1367 = vmatpush1.msra.mxu0 %v617
        %1368 = vmatprep.subr.mxu0 %v628
        %1369 = vmatpush1.msra.mxu0 %v627
        %1370 = vmatprep.subr.mxu0 %v638
        %1371 = vmatpush1.msra.mxu0 %v637
        %1372 = vmatprep.subr.mxu0 %v648
        %1373 = vmatpush1.msra.mxu0 %v647
        %1374 = vmatprep.subr.mxu0 %v658
        %1375 = vmatpush1.msra.mxu0 %v657
        %1376 = vmatprep.subr.mxu0 %v668
        %1377 = vmatpush1.msra.mxu0 %v667
        %1378 = vmatprep.subr.mxu0 %v678
        %1379 = vmatpush1.msra.mxu0 %v677
        %1380 = vmatprep.subr.mxu0 %v688
        %1381 = vmatpush1.msra.mxu0 %v687
        %1382 = vmatprep.subr.mxu0 %v698
        %1383 = vmatpush1.msra.mxu0 %v697
        %1384 = vmatprep.subr.mxu0 %v708
        %1385 = vmatpush1.msra.mxu0 %v707
        %1386 = vmatprep.subr.mxu0 %v718
        %1387 = vmatpush1.msra.mxu0 %v717
        %1388 = vmatprep.subr.mxu0 %v728
        %1389 = vmatpush1.msra.mxu0 %v727
        %1390 = vmatprep.subr.mxu0 %v738
        %1391 = vmatpush1.msra.mxu0 %v737
        %1392 = vmatprep.subr.mxu0 %v748
        %1393 = vmatpush1.msra.mxu0 %v747
        %1394 = vmatprep.subr.mxu0 %v758
        %1395 = vmatpush1.msra.mxu0 %v757
        %1396 = vmatprep.subr.mxu0 %v768
        %1397 = vmatpush1.msra.mxu0 %v767
        %1398 = vmatprep.subr.mxu0 %v778
        %1399 = vmatpush1.msra.mxu0 %v777
        %1400 = vmatprep.subr.mxu0 %v788
        %1401 = vmatpush1.msra.mxu0 %v787
        %1402 = vmatprep.subr.mxu0 %v798
        %1403 = vmatpush1.msra.mxu0 %v797
        %1404 = vmatprep.subr.mxu0 %v808
        %1405 = vmatpush1.msra.mxu0 %v807
        %1406 = vmatprep.subr.mxu0 %v818
        %1407 = vmatpush1.msra.mxu0 %v817
        %1408 = vmatprep.subr.mxu0 %v828
        %1409 = vmatpush1.msra.mxu0 %v827
        %1410 = vmatprep.subr.mxu0 %v838
        %1411 = vmatpush1.msra.mxu0 %v837
        %1412 = vmatprep.subr.mxu0 %v848
        %1413 = vmatpush1.msra.mxu0 %v847
        %1414 = vmatprep.subr.mxu0 %v858
        %1415 = vmatpush1.msra.mxu0 %v857
        %1416 = vmatprep.subr.mxu0 %v868
        %1417 = vmatpush1.msra.mxu0 %v867
        %1418 = vmatprep.subr.mxu0 %v878
        %1419 = vmatpush1.msra.mxu0 %v877
        %1420 = vmatprep.mubr.f32.mxu0 %v243
        %1421 = vmatmul.mubr.f32.gmra.mrb[0].mxu0 %v242
        %v1422 = vpop.f32.mrb[0].mxu0
        %v1423 = vadd.f32 %v1352, %v1422
        %v1424 = vpop.f32.mrb[0].mxu0
        %v1425 = vadd.f32 %v1354, %v1424
        %1426 = vdwg.mxu0
        %1427 = vmatprep.subr.mxu0 %v888
        %1428 = vmatpush1.msra.mxu0 %v887
        %1429 = vmatprep.subr.mxu0 %v898
        %1430 = vmatpush1.msra.mxu0 %v897
        %1431 = vmatprep.subr.mxu0 %v908
        %1432 = vmatpush1.msra.mxu0 %v907
        %1433 = vmatprep.subr.mxu0 %v918
        %1434 = vmatpush1.msra.mxu0 %v917
        %1435 = vmatprep.subr.mxu0 %v928
        %1436 = vmatpush1.msra.mxu0 %v927
        %1437 = vmatprep.subr.mxu0 %v938
        %1438 = vmatpush1.msra.mxu0 %v937
        %1439 = vmatprep.subr.mxu0 %v948
        %1440 = vmatpush1.msra.mxu0 %v947
        %1441 = vmatprep.subr.mxu0 %v958
        %1442 = vmatpush1.msra.mxu0 %v957
        %1443 = vmatprep.subr.mxu0 %v968
        %1444 = vmatpush1.msra.mxu0 %v967
        %1445 = vmatprep.subr.mxu0 %v978
        %1446 = vmatpush1.msra.mxu0 %v977
        %1447 = vmatprep.subr.mxu0 %v988
        %1448 = vmatpush1.msra.mxu0 %v987
        %1449 = vmatprep.subr.mxu0 %v998
        %1450 = vmatpush1.msra.mxu0 %v997
        %1451 = vmatprep.subr.mxu0 %v1008
        %1452 = vmatpush1.msra.mxu0 %v1007
        %1453 = vmatprep.subr.mxu0 %v1018
        %1454 = vmatpush1.msra.mxu0 %v1017
        %1455 = vmatprep.subr.mxu0 %v1028
        %1456 = vmatpush1.msra.mxu0 %v1027
        %1457 = vmatprep.subr.mxu0 %v1038
        %1458 = vmatpush1.msra.mxu0 %v1037
        %1459 = vmatprep.subr.mxu0 %v1048
        %1460 = vmatpush1.msra.mxu0 %v1047
        %1461 = vmatprep.subr.mxu0 %v1058
        %1462 = vmatpush1.msra.mxu0 %v1057
        %1463 = vmatprep.subr.mxu0 %v1068
        %1464 = vmatpush1.msra.mxu0 %v1067
        %1465 = vmatprep.subr.mxu0 %v1078
        %1466 = vmatpush1.msra.mxu0 %v1077
        %1467 = vmatprep.subr.mxu0 %v1088
        %1468 = vmatpush1.msra.mxu0 %v1087
        %1469 = vmatprep.subr.mxu0 %v1098
        %1470 = vmatpush1.msra.mxu0 %v1097
        %1471 = vmatprep.subr.mxu0 %v1108
        %1472 = vmatpush1.msra.mxu0 %v1107
        %1473 = vmatprep.subr.mxu0 %v1118
        %1474 = vmatpush1.msra.mxu0 %v1117
        %1475 = vmatprep.subr.mxu0 %v1128
        %1476 = vmatpush1.msra.mxu0 %v1127
        %1477 = vmatprep.subr.mxu0 %v1138
        %1478 = vmatpush1.msra.mxu0 %v1137
        %1479 = vmatprep.subr.mxu0 %v1148
        %1480 = vmatpush1.msra.mxu0 %v1147
        %1481 = vmatprep.subr.mxu0 %v1158
        %1482 = vmatpush1.msra.mxu0 %v1157
        %1483 = vmatprep.subr.mxu0 %v1168
        %1484 = vmatpush1.msra.mxu0 %v1167
        %1485 = vmatprep.subr.mxu0 %v1178
        %1486 = vmatpush1.msra.mxu0 %v1177
        %1487 = vmatprep.subr.mxu0 %v1188
        %1488 = vmatpush1.msra.mxu0 %v1187
        %1489 = vmatprep.subr.mxu0 %v1198
        %1490 = vmatpush1.msra.mxu0 %v1197
        %1491 = vmatprep.mubr.f32.mxu0 %v245
        %1492 = vmatmul.mubr.f32.gmra.mrb[0].mxu0 %v244
        %v1493 = vpop.f32.mrb[0].mxu0
        %v1494 = vadd.f32 %v1423, %v1493
        %v1495 = vpop.f32.mrb[0].mxu0
        %v1496 = vadd.f32 %v1425, %v1495
        %1497 = vdwg.mxu0
        %1498 = vmatprep.subr.mxu0 %v1208
        %1499 = vmatpush1.msra.mxu0 %v1207
        %1500 = vmatprep.subr.mxu0 %v1218
        %1501 = vmatpush1.msra.mxu0 %v1217
        %1502 = vmatprep.subr.mxu0 0.0
        %1503 = vmatpush1.msra.mxu0 0.0
        %1504 = vmatprep.subr.mxu0 0.0
        %1505 = vmatpush1.msra.mxu0 0.0
        %1506 = vmatprep.subr.mxu0 0.0
        %1507 = vmatpush1.msra.mxu0 0.0
        %1508 = vmatprep.subr.mxu0 0.0
        %1509 = vmatpush1.msra.mxu0 0.0
        %1510 = vmatprep.subr.mxu0 0.0
        %1511 = vmatpush1.msra.mxu0 0.0
        %1512 = vmatprep.subr.mxu0 0.0
        %1513 = vmatpush1.msra.mxu0 0.0
        %1514 = vmatprep.subr.mxu0 0.0
        %1515 = vmatpush1.msra.mxu0 0.0
        %1516 = vmatprep.subr.mxu0 0.0
        %1517 = vmatpush1.msra.mxu0 0.0
        %1518 = vmatprep.subr.mxu0 0.0
        %1519 = vmatpush1.msra.mxu0 0.0
        %1520 = vmatprep.subr.mxu0 0.0
        %1521 = vmatpush1.msra.mxu0 0.0
        %1522 = vmatprep.subr.mxu0 0.0
        %1523 = vmatpush1.msra.mxu0 0.0
        %1524 = vmatprep.subr.mxu0 0.0
        %1525 = vmatpush1.msra.mxu0 0.0
        %1526 = vmatprep.subr.mxu0 0.0
        %1527 = vmatpush1.msra.mxu0 0.0
        %1528 = vmatprep.subr.mxu0 0.0
        %1529 = vmatpush1.msra.mxu0 0.0
        %1530 = vmatprep.subr.mxu0 0.0
        %1531 = vmatpush1.msra.mxu0 0.0
        %1532 = vmatprep.subr.mxu0 0.0
        %1533 = vmatpush1.msra.mxu0 0.0
        %1534 = vmatprep.subr.mxu0 0.0
        %1535 = vmatpush1.msra.mxu0 0.0
        %1536 = vmatprep.subr.mxu0 0.0
        %1537 = vmatpush1.msra.mxu0 0.0
        %1538 = vmatprep.subr.mxu0 0.0
        %1539 = vmatpush1.msra.mxu0 0.0
        %1540 = vmatprep.subr.mxu0 0.0
        %1541 = vmatpush1.msra.mxu0 0.0
        %1542 = vmatprep.subr.mxu0 0.0
        %1543 = vmatpush1.msra.mxu0 0.0
        %1544 = vmatprep.subr.mxu0 0.0
        %1545 = vmatpush1.msra.mxu0 0.0
        %1546 = vmatprep.subr.mxu0 0.0
        %1547 = vmatpush1.msra.mxu0 0.0
        %1548 = vmatprep.subr.mxu0 0.0
        %1549 = vmatpush1.msra.mxu0 0.0
        %1550 = vmatprep.subr.mxu0 0.0
        %1551 = vmatpush1.msra.mxu0 0.0
        %1552 = vmatprep.subr.mxu0 0.0
        %1553 = vmatpush1.msra.mxu0 0.0
        %1554 = vmatprep.subr.mxu0 0.0
        %1555 = vmatpush1.msra.mxu0 0.0
        %1556 = vmatprep.subr.mxu0 0.0
        %1557 = vmatpush1.msra.mxu0 0.0
        %1558 = vmatprep.subr.mxu0 0.0
        %1559 = vmatpush1.msra.mxu0 0.0
        %1560 = vmatprep.subr.mxu0 0.0
        %1561 = vmatpush1.msra.mxu0 0.0
        %1562 = vmatprep.mubr.f32.mxu0 0.0
        %1563 = vmatmul.mubr.f32.gmra.mrb[0].mxu0 %v1283
        %v1564 = vpop.f32.mrb[0].mxu0
        %v1565 = vadd.f32 %v1494, %v1564
        %v1566 = vpop.f32.mrb[0].mxu0
        %v1567 = vadd.f32 %v1496, %v1566
        %1568 = vdwg.mxu0
        %1569 = vmatprep.subr.mxu0 %v250
        %1570 = vmatpush1.msra.mxu0 %v249
        %1571 = vmatprep.subr.mxu0 %v260
        %1572 = vmatpush1.msra.mxu0 %v259
        %1573 = vmatprep.subr.mxu0 %v270
        %1574 = vmatpush1.msra.mxu0 %v269
        %1575 = vmatprep.subr.mxu0 %v280
        %1576 = vmatpush1.msra.mxu0 %v279
        %1577 = vmatprep.subr.mxu0 %v290
        %1578 = vmatpush1.msra.mxu0 %v289
        %1579 = vmatprep.subr.mxu0 %v300
        %1580 = vmatpush1.msra.mxu0 %v299
        %1581 = vmatprep.subr.mxu0 %v310
        %1582 = vmatpush1.msra.mxu0 %v309
        %1583 = vmatprep.subr.mxu0 %v320
        %1584 = vmatpush1.msra.mxu0 %v319
        %1585 = vmatprep.subr.mxu0 %v330
        %1586 = vmatpush1.msra.mxu0 %v329
        %1587 = vmatprep.subr.mxu0 %v340
        %1588 = vmatpush1.msra.mxu0 %v339
        %1589 = vmatprep.subr.mxu0 %v350
        %1590 = vmatpush1.msra.mxu0 %v349
        %1591 = vmatprep.subr.mxu0 %v360
        %1592 = vmatpush1.msra.mxu0 %v359
        %1593 = vmatprep.subr.mxu0 %v370
        %1594 = vmatpush1.msra.mxu0 %v369
        %1595 = vmatprep.subr.mxu0 %v380
        %1596 = vmatpush1.msra.mxu0 %v379
        %1597 = vmatprep.subr.mxu0 %v390
        %1598 = vmatpush1.msra.mxu0 %v389
        %1599 = vmatprep.subr.mxu0 %v400
        %1600 = vmatpush1.msra.mxu0 %v399
        %1601 = vmatprep.subr.mxu0 %v410
        %1602 = vmatpush1.msra.mxu0 %v409
        %1603 = vmatprep.subr.mxu0 %v420
        %1604 = vmatpush1.msra.mxu0 %v419
        %1605 = vmatprep.subr.mxu0 %v430
        %1606 = vmatpush1.msra.mxu0 %v429
        %1607 = vmatprep.subr.mxu0 %v440
        %1608 = vmatpush1.msra.mxu0 %v439
        %1609 = vmatprep.subr.mxu0 %v450
        %1610 = vmatpush1.msra.mxu0 %v449
        %1611 = vmatprep.subr.mxu0 %v460
        %1612 = vmatpush1.msra.mxu0 %v459
        %1613 = vmatprep.subr.mxu0 %v470
        %1614 = vmatpush1.msra.mxu0 %v469
        %1615 = vmatprep.subr.mxu0 %v480
        %1616 = vmatpush1.msra.mxu0 %v479
        %1617 = vmatprep.subr.mxu0 %v490
        %1618 = vmatpush1.msra.mxu0 %v489
        %1619 = vmatprep.subr.mxu0 %v500
        %1620 = vmatpush1.msra.mxu0 %v499
        %1621 = vmatprep.subr.mxu0 %v510
        %1622 = vmatpush1.msra.mxu0 %v509
        %1623 = vmatprep.subr.mxu0 %v520
        %1624 = vmatpush1.msra.mxu0 %v519
        %1625 = vmatprep.subr.mxu0 %v530
        %1626 = vmatpush1.msra.mxu0 %v529
        %1627 = vmatprep.subr.mxu0 %v540
        %1628 = vmatpush1.msra.mxu0 %v539
        %1629 = vmatprep.subr.mxu0 %v550
        %1630 = vmatpush1.msra.mxu0 %v549
        %1631 = vmatprep.subr.mxu0 %v560
        %1632 = vmatpush1.msra.mxu0 %v559
        %1633 = vmatprep.mubr.f32.mxu0 %v241
        %1634 = vmatmul.mubr.f32.gmra.mrb[0].mxu0 %v240
        %v1635 = vpop.f32.mrb[0].mxu0
        %v1636 = vadd.f32 %v1242, %v1635
        %v1637 = vpop.f32.mrb[0].mxu0
        %v1638 = vadd.f32 %v1246, %v1637
        %1639 = vdwg.mxu0
        %1640 = vmatprep.subr.mxu0 %v570
        %1641 = vmatpush1.msra.mxu0 %v569
        %1642 = vmatprep.subr.mxu0 %v580
        %1643 = vmatpush1.msra.mxu0 %v579
        %1644 = vmatprep.subr.mxu0 %v590
        %1645 = vmatpush1.msra.mxu0 %v589
        %1646 = vmatprep.subr.mxu0 %v600
        %1647 = vmatpush1.msra.mxu0 %v599
        %1648 = vmatprep.subr.mxu0 %v610
        %1649 = vmatpush1.msra.mxu0 %v609
        %1650 = vmatprep.subr.mxu0 %v620
        %1651 = vmatpush1.msra.mxu0 %v619
        %1652 = vmatprep.subr.mxu0 %v630
        %1653 = vmatpush1.msra.mxu0 %v629
        %1654 = vmatprep.subr.mxu0 %v640
        %1655 = vmatpush1.msra.mxu0 %v639
        %1656 = vmatprep.subr.mxu0 %v650
        %1657 = vmatpush1.msra.mxu0 %v649
        %1658 = vmatprep.subr.mxu0 %v660
        %1659 = vmatpush1.msra.mxu0 %v659
        %1660 = vmatprep.subr.mxu0 %v670
        %1661 = vmatpush1.msra.mxu0 %v669
        %1662 = vmatprep.subr.mxu0 %v680
        %1663 = vmatpush1.msra.mxu0 %v679
        %1664 = vmatprep.subr.mxu0 %v690
        %1665 = vmatpush1.msra.mxu0 %v689
        %1666 = vmatprep.subr.mxu0 %v700
        %1667 = vmatpush1.msra.mxu0 %v699
        %1668 = vmatprep.subr.mxu0 %v710
        %1669 = vmatpush1.msra.mxu0 %v709
        %1670 = vmatprep.subr.mxu0 %v720
        %1671 = vmatpush1.msra.mxu0 %v719
        %1672 = vmatprep.subr.mxu0 %v730
        %1673 = vmatpush1.msra.mxu0 %v729
        %1674 = vmatprep.subr.mxu0 %v740
        %1675 = vmatpush1.msra.mxu0 %v739
        %1676 = vmatprep.subr.mxu0 %v750
        %1677 = vmatpush1.msra.mxu0 %v749
        %1678 = vmatprep.subr.mxu0 %v760
        %1679 = vmatpush1.msra.mxu0 %v759
        %1680 = vmatprep.subr.mxu0 %v770
        %1681 = vmatpush1.msra.mxu0 %v769
        %1682 = vmatprep.subr.mxu0 %v780
        %1683 = vmatpush1.msra.mxu0 %v779
        %1684 = vmatprep.subr.mxu0 %v790
        %1685 = vmatpush1.msra.mxu0 %v789
        %1686 = vmatprep.subr.mxu0 %v800
        %1687 = vmatpush1.msra.mxu0 %v799
        %1688 = vmatprep.subr.mxu0 %v810
        %1689 = vmatpush1.msra.mxu0 %v809
        %1690 = vmatprep.subr.mxu0 %v820
        %1691 = vmatpush1.msra.mxu0 %v819
        %1692 = vmatprep.subr.mxu0 %v830
        %1693 = vmatpush1.msra.mxu0 %v829
        %1694 = vmatprep.subr.mxu0 %v840
        %1695 = vmatpush1.msra.mxu0 %v839
        %1696 = vmatprep.subr.mxu0 %v850
        %1697 = vmatpush1.msra.mxu0 %v849
        %1698 = vmatprep.subr.mxu0 %v860
        %1699 = vmatpush1.msra.mxu0 %v859
        %1700 = vmatprep.subr.mxu0 %v870
        %1701 = vmatpush1.msra.mxu0 %v869
        %1702 = vmatprep.subr.mxu0 %v880
        %1703 = vmatpush1.msra.mxu0 %v879
        %1704 = vmatprep.mubr.f32.mxu0 %v243
        %1705 = vmatmul.mubr.f32.gmra.mrb[0].mxu0 %v242
        %v1706 = vpop.f32.mrb[0].mxu0
        %v1707 = vadd.f32 %v1636, %v1706
        %v1708 = vpop.f32.mrb[0].mxu0
        %v1709 = vadd.f32 %v1638, %v1708
        %1710 = vdwg.mxu0
        %1711 = vmatprep.subr.mxu0 %v890
        %1712 = vmatpush1.msra.mxu0 %v889
        %1713 = vmatprep.subr.mxu0 %v900
        %1714 = vmatpush1.msra.mxu0 %v899
        %1715 = vmatprep.subr.mxu0 %v910
        %1716 = vmatpush1.msra.mxu0 %v909
        %1717 = vmatprep.subr.mxu0 %v920
        %1718 = vmatpush1.msra.mxu0 %v919
        %1719 = vmatprep.subr.mxu0 %v930
        %1720 = vmatpush1.msra.mxu0 %v929
        %1721 = vmatprep.subr.mxu0 %v940
        %1722 = vmatpush1.msra.mxu0 %v939
        %1723 = vmatprep.subr.mxu0 %v950
        %1724 = vmatpush1.msra.mxu0 %v949
        %1725 = vmatprep.subr.mxu0 %v960
        %1726 = vmatpush1.msra.mxu0 %v959
        %1727 = vmatprep.subr.mxu0 %v970
        %1728 = vmatpush1.msra.mxu0 %v969
        %1729 = vmatprep.subr.mxu0 %v980
        %1730 = vmatpush1.msra.mxu0 %v979
        %1731 = vmatprep.subr.mxu0 %v990
        %1732 = vmatpush1.msra.mxu0 %v989
        %1733 = vmatprep.subr.mxu0 %v1000
        %1734 = vmatpush1.msra.mxu0 %v999
        %1735 = vmatprep.subr.mxu0 %v1010
        %1736 = vmatpush1.msra.mxu0 %v1009
        %1737 = vmatprep.subr.mxu0 %v1020
        %1738 = vmatpush1.msra.mxu0 %v1019
        %1739 = vmatprep.subr.mxu0 %v1030
        %1740 = vmatpush1.msra.mxu0 %v1029
        %1741 = vmatprep.subr.mxu0 %v1040
        %1742 = vmatpush1.msra.mxu0 %v1039
        %1743 = vmatprep.subr.mxu0 %v1050
        %1744 = vmatpush1.msra.mxu0 %v1049
        %1745 = vmatprep.subr.mxu0 %v1060
        %1746 = vmatpush1.msra.mxu0 %v1059
        %1747 = vmatprep.subr.mxu0 %v1070
        %1748 = vmatpush1.msra.mxu0 %v1069
        %1749 = vmatprep.subr.mxu0 %v1080
        %1750 = vmatpush1.msra.mxu0 %v1079
        %1751 = vmatprep.subr.mxu0 %v1090
        %1752 = vmatpush1.msra.mxu0 %v1089
        %1753 = vmatprep.subr.mxu0 %v1100
        %1754 = vmatpush1.msra.mxu0 %v1099
        %1755 = vmatprep.subr.mxu0 %v1110
        %1756 = vmatpush1.msra.mxu0 %v1109
        %1757 = vmatprep.subr.mxu0 %v1120
        %1758 = vmatpush1.msra.mxu0 %v1119
        %1759 = vmatprep.subr.mxu0 %v1130
        %1760 = vmatpush1.msra.mxu0 %v1129
        %1761 = vmatprep.subr.mxu0 %v1140
        %1762 = vmatpush1.msra.mxu0 %v1139
        %1763 = vmatprep.subr.mxu0 %v1150
        %1764 = vmatpush1.msra.mxu0 %v1149
        %1765 = vmatprep.subr.mxu0 %v1160
        %1766 = vmatpush1.msra.mxu0 %v1159
        %1767 = vmatprep.subr.mxu0 %v1170
        %1768 = vmatpush1.msra.mxu0 %v1169
        %1769 = vmatprep.subr.mxu0 %v1180
        %1770 = vmatpush1.msra.mxu0 %v1179
        %1771 = vmatprep.subr.mxu0 %v1190
        %1772 = vmatpush1.msra.mxu0 %v1189
        %1773 = vmatprep.subr.mxu0 %v1200
        %1774 = vmatpush1.msra.mxu0 %v1199
        %1775 = vmatprep.mubr.f32.mxu0 %v245
        %1776 = vmatmul.mubr.f32.gmra.mrb[0].mxu0 %v244
        %v1777 = vpop.f32.mrb[0].mxu0
        %v1778 = vadd.f32 %v1707, %v1777
        %v1779 = vpop.f32.mrb[0].mxu0
        %v1780 = vadd.f32 %v1709, %v1779
        %1781 = vdwg.mxu0
        %1782 = vmatprep.subr.mxu0 %v1210
        %1783 = vmatpush1.msra.mxu0 %v1209
        %1784 = vmatprep.subr.mxu0 %v1220
        %1785 = vmatpush1.msra.mxu0 %v1219
        %1786 = vmatprep.subr.mxu0 0.0
        %1787 = vmatpush1.msra.mxu0 0.0
        %1788 = vmatprep.subr.mxu0 0.0
        %1789 = vmatpush1.msra.mxu0 0.0
        %1790 = vmatprep.subr.mxu0 0.0
        %1791 = vmatpush1.msra.mxu0 0.0
        %1792 = vmatprep.subr.mxu0 0.0
        %1793 = vmatpush1.msra.mxu0 0.0
        %1794 = vmatprep.subr.mxu0 0.0
        %1795 = vmatpush1.msra.mxu0 0.0
        %1796 = vmatprep.subr.mxu0 0.0
        %1797 = vmatpush1.msra.mxu0 0.0
        %1798 = vmatprep.subr.mxu0 0.0
        %1799 = vmatpush1.msra.mxu0 0.0
        %1800 = vmatprep.subr.mxu0 0.0
        %1801 = vmatpush1.msra.mxu0 0.0
        %1802 = vmatprep.subr.mxu0 0.0
        %1803 = vmatpush1.msra.mxu0 0.0
        %1804 = vmatprep.subr.mxu0 0.0
        %1805 = vmatpush1.msra.mxu0 0.0
        %1806 = vmatprep.subr.mxu0 0.0
        %1807 = vmatpush1.msra.mxu0 0.0
        %1808 = vmatprep.subr.mxu0 0.0
        %1809 = vmatpush1.msra.mxu0 0.0
        %1810 = vmatprep.subr.mxu0 0.0
        %1811 = vmatpush1.msra.mxu0 0.0
        %1812 = vmatprep.subr.mxu0 0.0
        %1813 = vmatpush1.msra.mxu0 0.0
        %1814 = vmatprep.subr.mxu0 0.0
        %1815 = vmatpush1.msra.mxu0 0.0
        %1816 = vmatprep.subr.mxu0 0.0
        %1817 = vmatpush1.msra.mxu0 0.0
        %1818 = vmatprep.subr.mxu0 0.0
        %1819 = vmatpush1.msra.mxu0 0.0
        %1820 = vmatprep.subr.mxu0 0.0
        %1821 = vmatpush1.msra.mxu0 0.0
        %1822 = vmatprep.subr.mxu0 0.0
        %1823 = vmatpush1.msra.mxu0 0.0
        %1824 = vmatprep.subr.mxu0 0.0
        %1825 = vmatpush1.msra.mxu0 0.0
        %1826 = vmatprep.subr.mxu0 0.0
        %1827 = vmatpush1.msra.mxu0 0.0
        %1828 = vmatprep.subr.mxu0 0.0
        %1829 = vmatpush1.msra.mxu0 0.0
        %1830 = vmatprep.subr.mxu0 0.0
        %1831 = vmatpush1.msra.mxu0 0.0
        %1832 = vmatprep.subr.mxu0 0.0
        %1833 = vmatpush1.msra.mxu0 0.0
        %1834 = vmatprep.subr.mxu0 0.0
        %1835 = vmatpush1.msra.mxu0 0.0
        %1836 = vmatprep.subr.mxu0 0.0
        %1837 = vmatpush1.msra.mxu0 0.0
        %1838 = vmatprep.subr.mxu0 0.0
        %1839 = vmatpush1.msra.mxu0 0.0
        %1840 = vmatprep.subr.mxu0 0.0
        %1841 = vmatpush1.msra.mxu0 0.0
        %1842 = vmatprep.subr.mxu0 0.0
        %1843 = vmatpush1.msra.mxu0 0.0
        %1844 = vmatprep.subr.mxu0 0.0
        %1845 = vmatpush1.msra.mxu0 0.0
        %1846 = vmatprep.mubr.f32.mxu0 0.0
        %1847 = vmatmul.mubr.f32.gmra.mrb[0].mxu0 %v1283
        %v1848 = vpop.f32.mrb[0].mxu0
        %v1849 = vadd.f32 %v1778, %v1848
        %v1850 = vpop.f32.mrb[0].mxu0
        %v1851 = vadd.f32 %v1780, %v1850
        %1852 = vdwg.mxu0
        %1853 = vmatprep.subr.mxu0 %v252
        %1854 = vmatpush1.msra.mxu0 %v251
        %1855 = vmatprep.subr.mxu0 %v262
        %1856 = vmatpush1.msra.mxu0 %v261
        %1857 = vmatprep.subr.mxu0 %v272
        %1858 = vmatpush1.msra.mxu0 %v271
        %1859 = vmatprep.subr.mxu0 %v282
        %1860 = vmatpush1.msra.mxu0 %v281
        %1861 = vmatprep.subr.mxu0 %v292
        %1862 = vmatpush1.msra.mxu0 %v291
        %1863 = vmatprep.subr.mxu0 %v302
        %1864 = vmatpush1.msra.mxu0 %v301
        %1865 = vmatprep.subr.mxu0 %v312
        %1866 = vmatpush1.msra.mxu0 %v311
        %1867 = vmatprep.subr.mxu0 %v322
        %1868 = vmatpush1.msra.mxu0 %v321
        %1869 = vmatprep.subr.mxu0 %v332
        %1870 = vmatpush1.msra.mxu0 %v331
        %1871 = vmatprep.subr.mxu0 %v342
        %1872 = vmatpush1.msra.mxu0 %v341
        %1873 = vmatprep.subr.mxu0 %v352
        %1874 = vmatpush1.msra.mxu0 %v351
        %1875 = vmatprep.subr.mxu0 %v362
        %1876 = vmatpush1.msra.mxu0 %v361
        %1877 = vmatprep.subr.mxu0 %v372
        %1878 = vmatpush1.msra.mxu0 %v371
        %1879 = vmatprep.subr.mxu0 %v382
        %1880 = vmatpush1.msra.mxu0 %v381
        %1881 = vmatprep.subr.mxu0 %v392
        %1882 = vmatpush1.msra.mxu0 %v391
        %1883 = vmatprep.subr.mxu0 %v402
        %1884 = vmatpush1.msra.mxu0 %v401
        %1885 = vmatprep.subr.mxu0 %v412
        %1886 = vmatpush1.msra.mxu0 %v411
        %1887 = vmatprep.subr.mxu0 %v422
        %1888 = vmatpush1.msra.mxu0 %v421
        %1889 = vmatprep.subr.mxu0 %v432
        %1890 = vmatpush1.msra.mxu0 %v431
        %1891 = vmatprep.subr.mxu0 %v442
        %1892 = vmatpush1.msra.mxu0 %v441
        %1893 = vmatprep.subr.mxu0 %v452
        %1894 = vmatpush1.msra.mxu0 %v451
        %1895 = vmatprep.subr.mxu0 %v462
        %1896 = vmatpush1.msra.mxu0 %v461
        %1897 = vmatprep.subr.mxu0 %v472
        %1898 = vmatpush1.msra.mxu0 %v471
        %1899 = vmatprep.subr.mxu0 %v482
        %1900 = vmatpush1.msra.mxu0 %v481
        %1901 = vmatprep.subr.mxu0 %v492
        %1902 = vmatpush1.msra.mxu0 %v491
        %1903 = vmatprep.subr.mxu0 %v502
        %1904 = vmatpush1.msra.mxu0 %v501
        %1905 = vmatprep.subr.mxu0 %v512
        %1906 = vmatpush1.msra.mxu0 %v511
        %1907 = vmatprep.subr.mxu0 %v522
        %1908 = vmatpush1.msra.mxu0 %v521
        %1909 = vmatprep.subr.mxu0 %v532
        %1910 = vmatpush1.msra.mxu0 %v531
        %1911 = vmatprep.subr.mxu0 %v542
        %1912 = vmatpush1.msra.mxu0 %v541
        %1913 = vmatprep.subr.mxu0 %v552
        %1914 = vmatpush1.msra.mxu0 %v551
        %1915 = vmatprep.subr.mxu0 %v562
        %1916 = vmatpush1.msra.mxu0 %v561
        %1917 = vmatprep.mubr.f32.mxu0 %v241
        %1918 = vmatmul.mubr.f32.gmra.mrb[0].mxu0 %v240
        %v1919 = vpop.f32.mrb[0].mxu0
        %v1920 = vadd.f32 %v1250, %v1919
        %v1921 = vpop.f32.mrb[0].mxu0
        %v1922 = vadd.f32 %v1254, %v1921
        %1923 = vdwg.mxu0
        %1924 = vmatprep.subr.mxu0 %v572
        %1925 = vmatpush1.msra.mxu0 %v571
        %1926 = vmatprep.subr.mxu0 %v582
        %1927 = vmatpush1.msra.mxu0 %v581
        %1928 = vmatprep.subr.mxu0 %v592
        %1929 = vmatpush1.msra.mxu0 %v591
        %1930 = vmatprep.subr.mxu0 %v602
        %1931 = vmatpush1.msra.mxu0 %v601
        %1932 = vmatprep.subr.mxu0 %v612
        %1933 = vmatpush1.msra.mxu0 %v611
        %1934 = vmatprep.subr.mxu0 %v622
        %1935 = vmatpush1.msra.mxu0 %v621
        %1936 = vmatprep.subr.mxu0 %v632
        %1937 = vmatpush1.msra.mxu0 %v631
        %1938 = vmatprep.subr.mxu0 %v642
        %1939 = vmatpush1.msra.mxu0 %v641
        %1940 = vmatprep.subr.mxu0 %v652
        %1941 = vmatpush1.msra.mxu0 %v651
        %1942 = vmatprep.subr.mxu0 %v662
        %1943 = vmatpush1.msra.mxu0 %v661
        %1944 = vmatprep.subr.mxu0 %v672
        %1945 = vmatpush1.msra.mxu0 %v671
        %1946 = vmatprep.subr.mxu0 %v682
        %1947 = vmatpush1.msra.mxu0 %v681
        %1948 = vmatprep.subr.mxu0 %v692
        %1949 = vmatpush1.msra.mxu0 %v691
        %1950 = vmatprep.subr.mxu0 %v702
        %1951 = vmatpush1.msra.mxu0 %v701
        %1952 = vmatprep.subr.mxu0 %v712
        %1953 = vmatpush1.msra.mxu0 %v711
        %1954 = vmatprep.subr.mxu0 %v722
        %1955 = vmatpush1.msra.mxu0 %v721
        %1956 = vmatprep.subr.mxu0 %v732
        %1957 = vmatpush1.msra.mxu0 %v731
        %1958 = vmatprep.subr.mxu0 %v742
        %1959 = vmatpush1.msra.mxu0 %v741
        %1960 = vmatprep.subr.mxu0 %v752
        %1961 = vmatpush1.msra.mxu0 %v751
        %1962 = vmatprep.subr.mxu0 %v762
        %1963 = vmatpush1.msra.mxu0 %v761
        %1964 = vmatprep.subr.mxu0 %v772
        %1965 = vmatpush1.msra.mxu0 %v771
        %1966 = vmatprep.subr.mxu0 %v782
        %1967 = vmatpush1.msra.mxu0 %v781
        %1968 = vmatprep.subr.mxu0 %v792
        %1969 = vmatpush1.msra.mxu0 %v791
        %1970 = vmatprep.subr.mxu0 %v802
        %1971 = vmatpush1.msra.mxu0 %v801
        %1972 = vmatprep.subr.mxu0 %v812
        %1973 = vmatpush1.msra.mxu0 %v811
        %1974 = vmatprep.subr.mxu0 %v822
        %1975 = vmatpush1.msra.mxu0 %v821
        %1976 = vmatprep.subr.mxu0 %v832
        %1977 = vmatpush1.msra.mxu0 %v831
        %1978 = vmatprep.subr.mxu0 %v842
        %1979 = vmatpush1.msra.mxu0 %v841
        %1980 = vmatprep.subr.mxu0 %v852
        %1981 = vmatpush1.msra.mxu0 %v851
        %1982 = vmatprep.subr.mxu0 %v862
        %1983 = vmatpush1.msra.mxu0 %v861
        %1984 = vmatprep.subr.mxu0 %v872
        %1985 = vmatpush1.msra.mxu0 %v871
        %1986 = vmatprep.subr.mxu0 %v882
        %1987 = vmatpush1.msra.mxu0 %v881
        %1988 = vmatprep.mubr.f32.mxu0 %v243
        %1989 = vmatmul.mubr.f32.gmra.mrb[0].mxu0 %v242
        %v1990 = vpop.f32.mrb[0].mxu0
        %v1991 = vadd.f32 %v1920, %v1990
        %v1992 = vpop.f32.mrb[0].mxu0
        %v1993 = vadd.f32 %v1922, %v1992
        %1994 = vdwg.mxu0
        %1995 = vmatprep.subr.mxu0 %v892
        %1996 = vmatpush1.msra.mxu0 %v891
        %1997 = vmatprep.subr.mxu0 %v902
        %1998 = vmatpush1.msra.mxu0 %v901
        %1999 = vmatprep.subr.mxu0 %v912
        %2000 = vmatpush1.msra.mxu0 %v911
        %2001 = vmatprep.subr.mxu0 %v922
        %2002 = vmatpush1.msra.mxu0 %v921
        %2003 = vmatprep.subr.mxu0 %v932
        %2004 = vmatpush1.msra.mxu0 %v931
        %2005 = vmatprep.subr.mxu0 %v942
        %2006 = vmatpush1.msra.mxu0 %v941
        %2007 = vmatprep.subr.mxu0 %v952
        %2008 = vmatpush1.msra.mxu0 %v951
        %2009 = vmatprep.subr.mxu0 %v962
        %2010 = vmatpush1.msra.mxu0 %v961
        %2011 = vmatprep.subr.mxu0 %v972
        %2012 = vmatpush1.msra.mxu0 %v971
        %2013 = vmatprep.subr.mxu0 %v982
        %2014 = vmatpush1.msra.mxu0 %v981
        %2015 = vmatprep.subr.mxu0 %v992
        %2016 = vmatpush1.msra.mxu0 %v991
        %2017 = vmatprep.subr.mxu0 %v1002
        %2018 = vmatpush1.msra.mxu0 %v1001
        %2019 = vmatprep.subr.mxu0 %v1012
        %2020 = vmatpush1.msra.mxu0 %v1011
        %2021 = vmatprep.subr.mxu0 %v1022
        %2022 = vmatpush1.msra.mxu0 %v1021
        %2023 = vmatprep.subr.mxu0 %v1032
        %2024 = vmatpush1.msra.mxu0 %v1031
        %2025 = vmatprep.subr.mxu0 %v1042
        %2026 = vmatpush1.msra.mxu0 %v1041
        %2027 = vmatprep.subr.mxu0 %v1052
        %2028 = vmatpush1.msra.mxu0 %v1051
        %2029 = vmatprep.subr.mxu0 %v1062
        %2030 = vmatpush1.msra.mxu0 %v1061
        %2031 = vmatprep.subr.mxu0 %v1072
        %2032 = vmatpush1.msra.mxu0 %v1071
        %2033 = vmatprep.subr.mxu0 %v1082
        %2034 = vmatpush1.msra.mxu0 %v1081
        %2035 = vmatprep.subr.mxu0 %v1092
        %2036 = vmatpush1.msra.mxu0 %v1091
        %2037 = vmatprep.subr.mxu0 %v1102
        %2038 = vmatpush1.msra.mxu0 %v1101
        %2039 = vmatprep.subr.mxu0 %v1112
        %2040 = vmatpush1.msra.mxu0 %v1111
        %2041 = vmatprep.subr.mxu0 %v1122
        %2042 = vmatpush1.msra.mxu0 %v1121
        %2043 = vmatprep.subr.mxu0 %v1132
        %2044 = vmatpush1.msra.mxu0 %v1131
        %2045 = vmatprep.subr.mxu0 %v1142
        %2046 = vmatpush1.msra.mxu0 %v1141
        %2047 = vmatprep.subr.mxu0 %v1152
        %2048 = vmatpush1.msra.mxu0 %v1151
        %2049 = vmatprep.subr.mxu0 %v1162
        %2050 = vmatpush1.msra.mxu0 %v1161
        %2051 = vmatprep.subr.mxu0 %v1172
        %2052 = vmatpush1.msra.mxu0 %v1171
        %2053 = vmatprep.subr.mxu0 %v1182
        %2054 = vmatpush1.msra.mxu0 %v1181
        %2055 = vmatprep.subr.mxu0 %v1192
        %2056 = vmatpush1.msra.mxu0 %v1191
        %2057 = vmatprep.subr.mxu0 %v1202
        %2058 = vmatpush1.msra.mxu0 %v1201
        %2059 = vmatprep.mubr.f32.mxu0 %v245
        %2060 = vmatmul.mubr.f32.gmra.mrb[0].mxu0 %v244
        %v2061 = vpop.f32.mrb[0].mxu0
        %v2062 = vadd.f32 %v1991, %v2061
        %v2063 = vpop.f32.mrb[0].mxu0
        %v2064 = vadd.f32 %v1993, %v2063
        %2065 = vdwg.mxu0
        %2066 = vmatprep.subr.mxu0 %v1212
        %2067 = vmatpush1.msra.mxu0 %v1211
        %2068 = vmatprep.subr.mxu0 %v1222
        %2069 = vmatpush1.msra.mxu0 %v1221
        %2070 = vmatprep.subr.mxu0 0.0
        %2071 = vmatpush1.msra.mxu0 0.0
        %2072 = vmatprep.subr.mxu0 0.0
        %2073 = vmatpush1.msra.mxu0 0.0
        %2074 = vmatprep.subr.mxu0 0.0
        %2075 = vmatpush1.msra.mxu0 0.0
        %2076 = vmatprep.subr.mxu0 0.0
        %2077 = vmatpush1.msra.mxu0 0.0
        %2078 = vmatprep.subr.mxu0 0.0
        %2079 = vmatpush1.msra.mxu0 0.0
        %2080 = vmatprep.subr.mxu0 0.0
        %2081 = vmatpush1.msra.mxu0 0.0
        %2082 = vmatprep.subr.mxu0 0.0
        %2083 = vmatpush1.msra.mxu0 0.0
        %2084 = vmatprep.subr.mxu0 0.0
        %2085 = vmatpush1.msra.mxu0 0.0
        %2086 = vmatprep.subr.mxu0 0.0
        %2087 = vmatpush1.msra.mxu0 0.0
        %2088 = vmatprep.subr.mxu0 0.0
        %2089 = vmatpush1.msra.mxu0 0.0
        %2090 = vmatprep.subr.mxu0 0.0
        %2091 = vmatpush1.msra.mxu0 0.0
        %2092 = vmatprep.subr.mxu0 0.0
        %2093 = vmatpush1.msra.mxu0 0.0
        %2094 = vmatprep.subr.mxu0 0.0
        %2095 = vmatpush1.msra.mxu0 0.0
        %2096 = vmatprep.subr.mxu0 0.0
        %2097 = vmatpush1.msra.mxu0 0.0
        %2098 = vmatprep.subr.mxu0 0.0
        %2099 = vmatpush1.msra.mxu0 0.0
        %2100 = vmatprep.subr.mxu0 0.0
        %2101 = vmatpush1.msra.mxu0 0.0
        %2102 = vmatprep.subr.mxu0 0.0
        %2103 = vmatpush1.msra.mxu0 0.0
        %2104 = vmatprep.subr.mxu0 0.0
        %2105 = vmatpush1.msra.mxu0 0.0
        %2106 = vmatprep.subr.mxu0 0.0
        %2107 = vmatpush1.msra.mxu0 0.0
        %2108 = vmatprep.subr.mxu0 0.0
        %2109 = vmatpush1.msra.mxu0 0.0
        %2110 = vmatprep.subr.mxu0 0.0
        %2111 = vmatpush1.msra.mxu0 0.0
        %2112 = vmatprep.subr.mxu0 0.0
        %2113 = vmatpush1.msra.mxu0 0.0
        %2114 = vmatprep.subr.mxu0 0.0
        %2115 = vmatpush1.msra.mxu0 0.0
        %2116 = vmatprep.subr.mxu0 0.0
        %2117 = vmatpush1.msra.mxu0 0.0
        %2118 = vmatprep.subr.mxu0 0.0
        %2119 = vmatpush1.msra.mxu0 0.0
        %2120 = vmatprep.subr.mxu0 0.0
        %2121 = vmatpush1.msra.mxu0 0.0
        %2122 = vmatprep.subr.mxu0 0.0
        %2123 = vmatpush1.msra.mxu0 0.0
        %2124 = vmatprep.subr.mxu0 0.0
        %2125 = vmatpush1.msra.mxu0 0.0
        %2126 = vmatprep.subr.mxu0 0.0
        %2127 = vmatpush1.msra.mxu0 0.0
        %2128 = vmatprep.subr.mxu0 0.0
        %2129 = vmatpush1.msra.mxu0 0.0
        %2130 = vmatprep.mubr.f32.mxu0 0.0
        %2131 = vmatmul.mubr.f32.gmra.mrb[0].mxu0 %v1283
        %v2132 = vpop.f32.mrb[0].mxu0
        %v2133 = vadd.f32 %v2062, %v2132
        %v2134 = vpop.f32.mrb[0].mxu0
        %v2135 = vadd.f32 %v2064, %v2134
        %2136 = vdwg.mxu0
        %2137 = vmatprep.subr.mxu0 %v254
        %2138 = vmatpush1.msra.mxu0 %v253
        %2139 = vmatprep.subr.mxu0 %v264
        %2140 = vmatpush1.msra.mxu0 %v263
        %2141 = vmatprep.subr.mxu0 %v274
        %2142 = vmatpush1.msra.mxu0 %v273
        %2143 = vmatprep.subr.mxu0 %v284
        %2144 = vmatpush1.msra.mxu0 %v283
        %2145 = vmatprep.subr.mxu0 %v294
        %2146 = vmatpush1.msra.mxu0 %v293
        %2147 = vmatprep.subr.mxu0 %v304
        %2148 = vmatpush1.msra.mxu0 %v303
        %2149 = vmatprep.subr.mxu0 %v314
        %2150 = vmatpush1.msra.mxu0 %v313
        %2151 = vmatprep.subr.mxu0 %v324
        %2152 = vmatpush1.msra.mxu0 %v323
        %2153 = vmatprep.subr.mxu0 %v334
        %2154 = vmatpush1.msra.mxu0 %v333
        %2155 = vmatprep.subr.mxu0 %v344
        %2156 = vmatpush1.msra.mxu0 %v343
        %2157 = vmatprep.subr.mxu0 %v354
        %2158 = vmatpush1.msra.mxu0 %v353
        %2159 = vmatprep.subr.mxu0 %v364
        %2160 = vmatpush1.msra.mxu0 %v363
        %2161 = vmatprep.subr.mxu0 %v374
        %2162 = vmatpush1.msra.mxu0 %v373
        %2163 = vmatprep.subr.mxu0 %v384
        %2164 = vmatpush1.msra.mxu0 %v383
        %2165 = vmatprep.subr.mxu0 %v394
        %2166 = vmatpush1.msra.mxu0 %v393
        %2167 = vmatprep.subr.mxu0 %v404
        %2168 = vmatpush1.msra.mxu0 %v403
        %2169 = vmatprep.subr.mxu0 %v414
        %2170 = vmatpush1.msra.mxu0 %v413
        %2171 = vmatprep.subr.mxu0 %v424
        %2172 = vmatpush1.msra.mxu0 %v423
        %2173 = vmatprep.subr.mxu0 %v434
        %2174 = vmatpush1.msra.mxu0 %v433
        %2175 = vmatprep.subr.mxu0 %v444
        %2176 = vmatpush1.msra.mxu0 %v443
        %2177 = vmatprep.subr.mxu0 %v454
        %2178 = vmatpush1.msra.mxu0 %v453
        %2179 = vmatprep.subr.mxu0 %v464
        %2180 = vmatpush1.msra.mxu0 %v463
        %2181 = vmatprep.subr.mxu0 %v474
        %2182 = vmatpush1.msra.mxu0 %v473
        %2183 = vmatprep.subr.mxu0 %v484
        %2184 = vmatpush1.msra.mxu0 %v483
        %2185 = vmatprep.subr.mxu0 %v494
        %2186 = vmatpush1.msra.mxu0 %v493
        %2187 = vmatprep.subr.mxu0 %v504
        %2188 = vmatpush1.msra.mxu0 %v503
        %2189 = vmatprep.subr.mxu0 %v514
        %2190 = vmatpush1.msra.mxu0 %v513
        %2191 = vmatprep.subr.mxu0 %v524
        %2192 = vmatpush1.msra.mxu0 %v523
        %2193 = vmatprep.subr.mxu0 %v534
        %2194 = vmatpush1.msra.mxu0 %v533
        %2195 = vmatprep.subr.mxu0 %v544
        %2196 = vmatpush1.msra.mxu0 %v543
        %2197 = vmatprep.subr.mxu0 %v554
        %2198 = vmatpush1.msra.mxu0 %v553
        %2199 = vmatprep.subr.mxu0 %v564
        %2200 = vmatpush1.msra.mxu0 %v563
        %2201 = vmatprep.mubr.f32.mxu0 %v241
        %2202 = vmatmul.mubr.f32.gmra.mrb[0].mxu0 %v240
        %v2203 = vpop.f32.mrb[0].mxu0
        %v2204 = vadd.f32 %v1258, %v2203
        %v2205 = vpop.f32.mrb[0].mxu0
        %v2206 = vadd.f32 %v1262, %v2205
        %2207 = vdwg.mxu0
        %2208 = vmatprep.subr.mxu0 %v574
        %2209 = vmatpush1.msra.mxu0 %v573
        %2210 = vmatprep.subr.mxu0 %v584
        %2211 = vmatpush1.msra.mxu0 %v583
        %2212 = vmatprep.subr.mxu0 %v594
        %2213 = vmatpush1.msra.mxu0 %v593
        %2214 = vmatprep.subr.mxu0 %v604
        %2215 = vmatpush1.msra.mxu0 %v603
        %2216 = vmatprep.subr.mxu0 %v614
        %2217 = vmatpush1.msra.mxu0 %v613
        %2218 = vmatprep.subr.mxu0 %v624
        %2219 = vmatpush1.msra.mxu0 %v623
        %2220 = vmatprep.subr.mxu0 %v634
        %2221 = vmatpush1.msra.mxu0 %v633
        %2222 = vmatprep.subr.mxu0 %v644
        %2223 = vmatpush1.msra.mxu0 %v643
        %2224 = vmatprep.subr.mxu0 %v654
        %2225 = vmatpush1.msra.mxu0 %v653
        %2226 = vmatprep.subr.mxu0 %v664
        %2227 = vmatpush1.msra.mxu0 %v663
        %2228 = vmatprep.subr.mxu0 %v674
        %2229 = vmatpush1.msra.mxu0 %v673
        %2230 = vmatprep.subr.mxu0 %v684
        %2231 = vmatpush1.msra.mxu0 %v683
        %2232 = vmatprep.subr.mxu0 %v694
        %2233 = vmatpush1.msra.mxu0 %v693
        %2234 = vmatprep.subr.mxu0 %v704
        %2235 = vmatpush1.msra.mxu0 %v703
        %2236 = vmatprep.subr.mxu0 %v714
        %2237 = vmatpush1.msra.mxu0 %v713
        %2238 = vmatprep.subr.mxu0 %v724
        %2239 = vmatpush1.msra.mxu0 %v723
        %2240 = vmatprep.subr.mxu0 %v734
        %2241 = vmatpush1.msra.mxu0 %v733
        %2242 = vmatprep.subr.mxu0 %v744
        %2243 = vmatpush1.msra.mxu0 %v743
        %2244 = vmatprep.subr.mxu0 %v754
        %2245 = vmatpush1.msra.mxu0 %v753
        %2246 = vmatprep.subr.mxu0 %v764
        %2247 = vmatpush1.msra.mxu0 %v763
        %2248 = vmatprep.subr.mxu0 %v774
        %2249 = vmatpush1.msra.mxu0 %v773
        %2250 = vmatprep.subr.mxu0 %v784
        %2251 = vmatpush1.msra.mxu0 %v783
        %2252 = vmatprep.subr.mxu0 %v794
        %2253 = vmatpush1.msra.mxu0 %v793
        %2254 = vmatprep.subr.mxu0 %v804
        %2255 = vmatpush1.msra.mxu0 %v803
        %2256 = vmatprep.subr.mxu0 %v814
        %2257 = vmatpush1.msra.mxu0 %v813
        %2258 = vmatprep.subr.mxu0 %v824
        %2259 = vmatpush1.msra.mxu0 %v823
        %2260 = vmatprep.subr.mxu0 %v834
        %2261 = vmatpush1.msra.mxu0 %v833
        %2262 = vmatprep.subr.mxu0 %v844
        %2263 = vmatpush1.msra.mxu0 %v843
        %2264 = vmatprep.subr.mxu0 %v854
        %2265 = vmatpush1.msra.mxu0 %v853
        %2266 = vmatprep.subr.mxu0 %v864
        %2267 = vmatpush1.msra.mxu0 %v863
        %2268 = vmatprep.subr.mxu0 %v874
        %2269 = vmatpush1.msra.mxu0 %v873
        %2270 = vmatprep.subr.mxu0 %v884
        %2271 = vmatpush1.msra.mxu0 %v883
        %2272 = vmatprep.mubr.f32.mxu0 %v243
        %2273 = vmatmul.mubr.f32.gmra.mrb[0].mxu0 %v242
        %v2274 = vpop.f32.mrb[0].mxu0
        %v2275 = vadd.f32 %v2204, %v2274
        %v2276 = vpop.f32.mrb[0].mxu0
        %v2277 = vadd.f32 %v2206, %v2276
        %2278 = vdwg.mxu0
        %2279 = vmatprep.subr.mxu0 %v894
        %2280 = vmatpush1.msra.mxu0 %v893
        %2281 = vmatprep.subr.mxu0 %v904
        %2282 = vmatpush1.msra.mxu0 %v903
        %2283 = vmatprep.subr.mxu0 %v914
        %2284 = vmatpush1.msra.mxu0 %v913
        %2285 = vmatprep.subr.mxu0 %v924
        %2286 = vmatpush1.msra.mxu0 %v923
        %2287 = vmatprep.subr.mxu0 %v934
        %2288 = vmatpush1.msra.mxu0 %v933
        %2289 = vmatprep.subr.mxu0 %v944
        %2290 = vmatpush1.msra.mxu0 %v943
        %2291 = vmatprep.subr.mxu0 %v954
        %2292 = vmatpush1.msra.mxu0 %v953
        %2293 = vmatprep.subr.mxu0 %v964
        %2294 = vmatpush1.msra.mxu0 %v963
        %2295 = vmatprep.subr.mxu0 %v974
        %2296 = vmatpush1.msra.mxu0 %v973
        %2297 = vmatprep.subr.mxu0 %v984
        %2298 = vmatpush1.msra.mxu0 %v983
        %2299 = vmatprep.subr.mxu0 %v994
        %2300 = vmatpush1.msra.mxu0 %v993
        %2301 = vmatprep.subr.mxu0 %v1004
        %2302 = vmatpush1.msra.mxu0 %v1003
        %2303 = vmatprep.subr.mxu0 %v1014
        %2304 = vmatpush1.msra.mxu0 %v1013
        %2305 = vmatprep.subr.mxu0 %v1024
        %2306 = vmatpush1.msra.mxu0 %v1023
        %2307 = vmatprep.subr.mxu0 %v1034
        %2308 = vmatpush1.msra.mxu0 %v1033
        %2309 = vmatprep.subr.mxu0 %v1044
        %2310 = vmatpush1.msra.mxu0 %v1043
        %2311 = vmatprep.subr.mxu0 %v1054
        %2312 = vmatpush1.msra.mxu0 %v1053
        %2313 = vmatprep.subr.mxu0 %v1064
        %2314 = vmatpush1.msra.mxu0 %v1063
        %2315 = vmatprep.subr.mxu0 %v1074
        %2316 = vmatpush1.msra.mxu0 %v1073
        %2317 = vmatprep.subr.mxu0 %v1084
        %2318 = vmatpush1.msra.mxu0 %v1083
        %2319 = vmatprep.subr.mxu0 %v1094
        %2320 = vmatpush1.msra.mxu0 %v1093
        %2321 = vmatprep.subr.mxu0 %v1104
        %2322 = vmatpush1.msra.mxu0 %v1103
        %2323 = vmatprep.subr.mxu0 %v1114
        %2324 = vmatpush1.msra.mxu0 %v1113
        %2325 = vmatprep.subr.mxu0 %v1124
        %2326 = vmatpush1.msra.mxu0 %v1123
        %2327 = vmatprep.subr.mxu0 %v1134
        %2328 = vmatpush1.msra.mxu0 %v1133
        %2329 = vmatprep.subr.mxu0 %v1144
        %2330 = vmatpush1.msra.mxu0 %v1143
        %2331 = vmatprep.subr.mxu0 %v1154
        %2332 = vmatpush1.msra.mxu0 %v1153
        %2333 = vmatprep.subr.mxu0 %v1164
        %2334 = vmatpush1.msra.mxu0 %v1163
        %2335 = vmatprep.subr.mxu0 %v1174
        %2336 = vmatpush1.msra.mxu0 %v1173
        %2337 = vmatprep.subr.mxu0 %v1184
        %2338 = vmatpush1.msra.mxu0 %v1183
        %2339 = vmatprep.subr.mxu0 %v1194
        %2340 = vmatpush1.msra.mxu0 %v1193
        %2341 = vmatprep.subr.mxu0 %v1204
        %2342 = vmatpush1.msra.mxu0 %v1203
        %2343 = vmatprep.mubr.f32.mxu0 %v245
        %2344 = vmatmul.mubr.f32.gmra.mrb[0].mxu0 %v244
        %v2345 = vpop.f32.mrb[0].mxu0
        %v2346 = vadd.f32 %v2275, %v2345
        %v2347 = vpop.f32.mrb[0].mxu0
        %v2348 = vadd.f32 %v2277, %v2347
        %2349 = vdwg.mxu0
        %2350 = vmatprep.subr.mxu0 %v1214
        %2351 = vmatpush1.msra.mxu0 %v1213
        %2352 = vmatprep.subr.mxu0 %v1224
        %2353 = vmatpush1.msra.mxu0 %v1223
        %2354 = vmatprep.subr.mxu0 0.0
        %2355 = vmatpush1.msra.mxu0 0.0
        %2356 = vmatprep.subr.mxu0 0.0
        %2357 = vmatpush1.msra.mxu0 0.0
        %2358 = vmatprep.subr.mxu0 0.0
        %2359 = vmatpush1.msra.mxu0 0.0
        %2360 = vmatprep.subr.mxu0 0.0
        %2361 = vmatpush1.msra.mxu0 0.0
        %2362 = vmatprep.subr.mxu0 0.0
        %2363 = vmatpush1.msra.mxu0 0.0
        %2364 = vmatprep.subr.mxu0 0.0
        %2365 = vmatpush1.msra.mxu0 0.0
        %2366 = vmatprep.subr.mxu0 0.0
        %2367 = vmatpush1.msra.mxu0 0.0
        %2368 = vmatprep.subr.mxu0 0.0
        %2369 = vmatpush1.msra.mxu0 0.0
        %2370 = vmatprep.subr.mxu0 0.0
        %2371 = vmatpush1.msra.mxu0 0.0
        %2372 = vmatprep.subr.mxu0 0.0
        %2373 = vmatpush1.msra.mxu0 0.0
        %2374 = vmatprep.subr.mxu0 0.0
        %2375 = vmatpush1.msra.mxu0 0.0
        %2376 = vmatprep.subr.mxu0 0.0
        %2377 = vmatpush1.msra.mxu0 0.0
        %2378 = vmatprep.subr.mxu0 0.0
        %2379 = vmatpush1.msra.mxu0 0.0
        %2380 = vmatprep.subr.mxu0 0.0
        %2381 = vmatpush1.msra.mxu0 0.0
        %2382 = vmatprep.subr.mxu0 0.0
        %2383 = vmatpush1.msra.mxu0 0.0
        %2384 = vmatprep.subr.mxu0 0.0
        %2385 = vmatpush1.msra.mxu0 0.0
        %2386 = vmatprep.subr.mxu0 0.0
        %2387 = vmatpush1.msra.mxu0 0.0
        %2388 = vmatprep.subr.mxu0 0.0
        %2389 = vmatpush1.msra.mxu0 0.0
        %2390 = vmatprep.subr.mxu0 0.0
        %2391 = vmatpush1.msra.mxu0 0.0
        %2392 = vmatprep.subr.mxu0 0.0
        %2393 = vmatpush1.msra.mxu0 0.0
        %2394 = vmatprep.subr.mxu0 0.0
        %2395 = vmatpush1.msra.mxu0 0.0
        %2396 = vmatprep.subr.mxu0 0.0
        %2397 = vmatpush1.msra.mxu0 0.0
        %2398 = vmatprep.subr.mxu0 0.0
        %2399 = vmatpush1.msra.mxu0 0.0
        %2400 = vmatprep.subr.mxu0 0.0
        %2401 = vmatpush1.msra.mxu0 0.0
        %2402 = vmatprep.subr.mxu0 0.0
        %2403 = vmatpush1.msra.mxu0 0.0
        %2404 = vmatprep.subr.mxu0 0.0
        %2405 = vmatpush1.msra.mxu0 0.0
        %2406 = vmatprep.subr.mxu0 0.0
        %2407 = vmatpush1.msra.mxu0 0.0
        %2408 = vmatprep.subr.mxu0 0.0
        %2409 = vmatpush1.msra.mxu0 0.0
        %2410 = vmatprep.subr.mxu0 0.0
        %2411 = vmatpush1.msra.mxu0 0.0
        %2412 = vmatprep.subr.mxu0 0.0
        %2413 = vmatpush1.msra.mxu0 0.0
        %2414 = vmatprep.mubr.f32.mxu0 0.0
        %2415 = vmatmul.mubr.f32.gmra.mrb[0].mxu0 %v1283
        %v2416 = vpop.f32.mrb[0].mxu0
        %v2417 = vadd.f32 %v2346, %v2416
        %v2418 = vpop.f32.mrb[0].mxu0
        %v2419 = vadd.f32 %v2348, %v2418
        %2420 = vdwg.mxu0
        %2421 = vmatprep.subr.mxu0 %v256
        %2422 = vmatpush1.msra.mxu0 %v255
        %2423 = vmatprep.subr.mxu0 %v266
        %2424 = vmatpush1.msra.mxu0 %v265
        %2425 = vmatprep.subr.mxu0 %v276
        %2426 = vmatpush1.msra.mxu0 %v275
        %2427 = vmatprep.subr.mxu0 %v286
        %2428 = vmatpush1.msra.mxu0 %v285
        %2429 = vmatprep.subr.mxu0 %v296
        %2430 = vmatpush1.msra.mxu0 %v295
        %2431 = vmatprep.subr.mxu0 %v306
        %2432 = vmatpush1.msra.mxu0 %v305
        %2433 = vmatprep.subr.mxu0 %v316
        %2434 = vmatpush1.msra.mxu0 %v315
        %2435 = vmatprep.subr.mxu0 %v326
        %2436 = vmatpush1.msra.mxu0 %v325
        %2437 = vmatprep.subr.mxu0 %v336
        %2438 = vmatpush1.msra.mxu0 %v335
        %2439 = vmatprep.subr.mxu0 %v346
        %2440 = vmatpush1.msra.mxu0 %v345
        %2441 = vmatprep.subr.mxu0 %v356
        %2442 = vmatpush1.msra.mxu0 %v355
        %2443 = vmatprep.subr.mxu0 %v366
        %2444 = vmatpush1.msra.mxu0 %v365
        %2445 = vmatprep.subr.mxu0 %v376
        %2446 = vmatpush1.msra.mxu0 %v375
        %2447 = vmatprep.subr.mxu0 %v386
        %2448 = vmatpush1.msra.mxu0 %v385
        %2449 = vmatprep.subr.mxu0 %v396
        %2450 = vmatpush1.msra.mxu0 %v395
        %2451 = vmatprep.subr.mxu0 %v406
        %2452 = vmatpush1.msra.mxu0 %v405
        %2453 = vmatprep.subr.mxu0 %v416
        %2454 = vmatpush1.msra.mxu0 %v415
        %2455 = vmatprep.subr.mxu0 %v426
        %2456 = vmatpush1.msra.mxu0 %v425
        %2457 = vmatprep.subr.mxu0 %v436
        %2458 = vmatpush1.msra.mxu0 %v435
        %2459 = vmatprep.subr.mxu0 %v446
        %2460 = vmatpush1.msra.mxu0 %v445
        %2461 = vmatprep.subr.mxu0 %v456
        %2462 = vmatpush1.msra.mxu0 %v455
        %2463 = vmatprep.subr.mxu0 %v466
        %2464 = vmatpush1.msra.mxu0 %v465
        %2465 = vmatprep.subr.mxu0 %v476
        %2466 = vmatpush1.msra.mxu0 %v475
        %2467 = vmatprep.subr.mxu0 %v486
        %2468 = vmatpush1.msra.mxu0 %v485
        %2469 = vmatprep.subr.mxu0 %v496
        %2470 = vmatpush1.msra.mxu0 %v495
        %2471 = vmatprep.subr.mxu0 %v506
        %2472 = vmatpush1.msra.mxu0 %v505
        %2473 = vmatprep.subr.mxu0 %v516
        %2474 = vmatpush1.msra.mxu0 %v515
        %2475 = vmatprep.subr.mxu0 %v526
        %2476 = vmatpush1.msra.mxu0 %v525
        %2477 = vmatprep.subr.mxu0 %v536
        %2478 = vmatpush1.msra.mxu0 %v535
        %2479 = vmatprep.subr.mxu0 %v546
        %2480 = vmatpush1.msra.mxu0 %v545
        %2481 = vmatprep.subr.mxu0 %v556
        %2482 = vmatpush1.msra.mxu0 %v555
        %2483 = vmatprep.subr.mxu0 %v566
        %2484 = vmatpush1.msra.mxu0 %v565
        %2485 = vmatprep.mubr.f32.mxu0 %v241
        %2486 = vmatmul.mubr.f32.gmra.mrb[0].mxu0 %v240
        %v2487 = vpop.f32.mrb[0].mxu0
        %v2488 = vadd.f32 %v1266, %v2487
        %v2489 = vpop.f32.mrb[0].mxu0
        %v2490 = vadd.f32 %v1270, %v2489
        %2491 = vdwg.mxu0
        %2492 = vmatprep.subr.mxu0 %v576
        %2493 = vmatpush1.msra.mxu0 %v575
        %2494 = vmatprep.subr.mxu0 %v586
        %2495 = vmatpush1.msra.mxu0 %v585
        %2496 = vmatprep.subr.mxu0 %v596
        %2497 = vmatpush1.msra.mxu0 %v595
        %2498 = vmatprep.subr.mxu0 %v606
        %2499 = vmatpush1.msra.mxu0 %v605
        %2500 = vmatprep.subr.mxu0 %v616
        %2501 = vmatpush1.msra.mxu0 %v615
        %2502 = vmatprep.subr.mxu0 %v626
        %2503 = vmatpush1.msra.mxu0 %v625
        %2504 = vmatprep.subr.mxu0 %v636
        %2505 = vmatpush1.msra.mxu0 %v635
        %2506 = vmatprep.subr.mxu0 %v646
        %2507 = vmatpush1.msra.mxu0 %v645
        %2508 = vmatprep.subr.mxu0 %v656
        %2509 = vmatpush1.msra.mxu0 %v655
        %2510 = vmatprep.subr.mxu0 %v666
        %2511 = vmatpush1.msra.mxu0 %v665
        %2512 = vmatprep.subr.mxu0 %v676
        %2513 = vmatpush1.msra.mxu0 %v675
        %2514 = vmatprep.subr.mxu0 %v686
        %2515 = vmatpush1.msra.mxu0 %v685
        %2516 = vmatprep.subr.mxu0 %v696
        %2517 = vmatpush1.msra.mxu0 %v695
        %2518 = vmatprep.subr.mxu0 %v706
        %2519 = vmatpush1.msra.mxu0 %v705
        %2520 = vmatprep.subr.mxu0 %v716
        %2521 = vmatpush1.msra.mxu0 %v715
        %2522 = vmatprep.subr.mxu0 %v726
        %2523 = vmatpush1.msra.mxu0 %v725
        %2524 = vmatprep.subr.mxu0 %v736
        %2525 = vmatpush1.msra.mxu0 %v735
        %2526 = vmatprep.subr.mxu0 %v746
        %2527 = vmatpush1.msra.mxu0 %v745
        %2528 = vmatprep.subr.mxu0 %v756
        %2529 = vmatpush1.msra.mxu0 %v755
        %2530 = vmatprep.subr.mxu0 %v766
        %2531 = vmatpush1.msra.mxu0 %v765
        %2532 = vmatprep.subr.mxu0 %v776
        %2533 = vmatpush1.msra.mxu0 %v775
        %2534 = vmatprep.subr.mxu0 %v786
        %2535 = vmatpush1.msra.mxu0 %v785
        %2536 = vmatprep.subr.mxu0 %v796
        %2537 = vmatpush1.msra.mxu0 %v795
        %2538 = vmatprep.subr.mxu0 %v806
        %2539 = vmatpush1.msra.mxu0 %v805
        %2540 = vmatprep.subr.mxu0 %v816
        %2541 = vmatpush1.msra.mxu0 %v815
        %2542 = vmatprep.subr.mxu0 %v826
        %2543 = vmatpush1.msra.mxu0 %v825
        %2544 = vmatprep.subr.mxu0 %v836
        %2545 = vmatpush1.msra.mxu0 %v835
        %2546 = vmatprep.subr.mxu0 %v846
        %2547 = vmatpush1.msra.mxu0 %v845
        %2548 = vmatprep.subr.mxu0 %v856
        %2549 = vmatpush1.msra.mxu0 %v855
        %2550 = vmatprep.subr.mxu0 %v866
        %2551 = vmatpush1.msra.mxu0 %v865
        %2552 = vmatprep.subr.mxu0 %v876
        %2553 = vmatpush1.msra.mxu0 %v875
        %2554 = vmatprep.subr.mxu0 %v886
        %2555 = vmatpush1.msra.mxu0 %v885
        %2556 = vmatprep.mubr.f32.mxu0 %v243
        %2557 = vmatmul.mubr.f32.gmra.mrb[0].mxu0 %v242
        %v2558 = vpop.f32.mrb[0].mxu0
        %v2559 = vadd.f32 %v2488, %v2558
        %v2560 = vpop.f32.mrb[0].mxu0
        %v2561 = vadd.f32 %v2490, %v2560
        %2562 = vdwg.mxu0
        %2563 = vmatprep.subr.mxu0 %v896
        %2564 = vmatpush1.msra.mxu0 %v895
        %2565 = vmatprep.subr.mxu0 %v906
        %2566 = vmatpush1.msra.mxu0 %v905
        %2567 = vmatprep.subr.mxu0 %v916
        %2568 = vmatpush1.msra.mxu0 %v915
        %2569 = vmatprep.subr.mxu0 %v926
        %2570 = vmatpush1.msra.mxu0 %v925
        %2571 = vmatprep.subr.mxu0 %v936
        %2572 = vmatpush1.msra.mxu0 %v935
        %2573 = vmatprep.subr.mxu0 %v946
        %2574 = vmatpush1.msra.mxu0 %v945
        %2575 = vmatprep.subr.mxu0 %v956
        %2576 = vmatpush1.msra.mxu0 %v955
        %2577 = vmatprep.subr.mxu0 %v966
        %2578 = vmatpush1.msra.mxu0 %v965
        %2579 = vmatprep.subr.mxu0 %v976
        %2580 = vmatpush1.msra.mxu0 %v975
        %2581 = vmatprep.subr.mxu0 %v986
        %2582 = vmatpush1.msra.mxu0 %v985
        %2583 = vmatprep.subr.mxu0 %v996
        %2584 = vmatpush1.msra.mxu0 %v995
        %2585 = vmatprep.subr.mxu0 %v1006
        %2586 = vmatpush1.msra.mxu0 %v1005
        %2587 = vmatprep.subr.mxu0 %v1016
        %2588 = vmatpush1.msra.mxu0 %v1015
        %2589 = vmatprep.subr.mxu0 %v1026
        %2590 = vmatpush1.msra.mxu0 %v1025
        %2591 = vmatprep.subr.mxu0 %v1036
        %2592 = vmatpush1.msra.mxu0 %v1035
        %2593 = vmatprep.subr.mxu0 %v1046
        %2594 = vmatpush1.msra.mxu0 %v1045
        %2595 = vmatprep.subr.mxu0 %v1056
        %2596 = vmatpush1.msra.mxu0 %v1055
        %2597 = vmatprep.subr.mxu0 %v1066
        %2598 = vmatpush1.msra.mxu0 %v1065
        %2599 = vmatprep.subr.mxu0 %v1076
        %2600 = vmatpush1.msra.mxu0 %v1075
        %2601 = vmatprep.subr.mxu0 %v1086
        %2602 = vmatpush1.msra.mxu0 %v1085
        %2603 = vmatprep.subr.mxu0 %v1096
        %2604 = vmatpush1.msra.mxu0 %v1095
        %2605 = vmatprep.subr.mxu0 %v1106
        %2606 = vmatpush1.msra.mxu0 %v1105
        %2607 = vmatprep.subr.mxu0 %v1116
        %2608 = vmatpush1.msra.mxu0 %v1115
        %2609 = vmatprep.subr.mxu0 %v1126
        %2610 = vmatpush1.msra.mxu0 %v1125
        %2611 = vmatprep.subr.mxu0 %v1136
        %2612 = vmatpush1.msra.mxu0 %v1135
        %2613 = vmatprep.subr.mxu0 %v1146
        %2614 = vmatpush1.msra.mxu0 %v1145
        %2615 = vmatprep.subr.mxu0 %v1156
        %2616 = vmatpush1.msra.mxu0 %v1155
        %2617 = vmatprep.subr.mxu0 %v1166
        %2618 = vmatpush1.msra.mxu0 %v1165
        %2619 = vmatprep.subr.mxu0 %v1176
        %2620 = vmatpush1.msra.mxu0 %v1175
        %2621 = vmatprep.subr.mxu0 %v1186
        %2622 = vmatpush1.msra.mxu0 %v1185
        %2623 = vmatprep.subr.mxu0 %v1196
        %2624 = vmatpush1.msra.mxu0 %v1195
        %2625 = vmatprep.subr.mxu0 %v1206
        %2626 = vmatpush1.msra.mxu0 %v1205
        %2627 = vmatprep.mubr.f32.mxu0 %v245
        %2628 = vmatmul.mubr.f32.gmra.mrb[0].mxu0 %v244
        %v2629 = vpop.f32.mrb[0].mxu0
        %v2630 = vadd.f32 %v2559, %v2629
        %v2631 = vpop.f32.mrb[0].mxu0
        %v2632 = vadd.f32 %v2561, %v2631
        %2633 = vdwg.mxu0
        %2634 = vmatprep.subr.mxu0 %v1216
        %2635 = vmatpush1.msra.mxu0 %v1215
        %2636 = vmatprep.subr.mxu0 %v1226
        %2637 = vmatpush1.msra.mxu0 %v1225
        %2638 = vmatprep.subr.mxu0 0.0
        %2639 = vmatpush1.msra.mxu0 0.0
        %2640 = vmatprep.subr.mxu0 0.0
        %2641 = vmatpush1.msra.mxu0 0.0
        %2642 = vmatprep.subr.mxu0 0.0
        %2643 = vmatpush1.msra.mxu0 0.0
        %2644 = vmatprep.subr.mxu0 0.0
        %2645 = vmatpush1.msra.mxu0 0.0
        %2646 = vmatprep.subr.mxu0 0.0
        %2647 = vmatpush1.msra.mxu0 0.0
        %2648 = vmatprep.subr.mxu0 0.0
        %2649 = vmatpush1.msra.mxu0 0.0
        %2650 = vmatprep.subr.mxu0 0.0
        %2651 = vmatpush1.msra.mxu0 0.0
        %2652 = vmatprep.subr.mxu0 0.0
        %2653 = vmatpush1.msra.mxu0 0.0
        %2654 = vmatprep.subr.mxu0 0.0
        %2655 = vmatpush1.msra.mxu0 0.0
        %2656 = vmatprep.subr.mxu0 0.0
        %2657 = vmatpush1.msra.mxu0 0.0
        %2658 = vmatprep.subr.mxu0 0.0
        %2659 = vmatpush1.msra.mxu0 0.0
        %2660 = vmatprep.subr.mxu0 0.0
        %2661 = vmatpush1.msra.mxu0 0.0
        %2662 = vmatprep.subr.mxu0 0.0
        %2663 = vmatpush1.msra.mxu0 0.0
        %2664 = vmatprep.subr.mxu0 0.0
        %2665 = vmatpush1.msra.mxu0 0.0
        %2666 = vmatprep.subr.mxu0 0.0
        %2667 = vmatpush1.msra.mxu0 0.0
        %2668 = vmatprep.subr.mxu0 0.0
        %2669 = vmatpush1.msra.mxu0 0.0
        %2670 = vmatprep.subr.mxu0 0.0
        %2671 = vmatpush1.msra.mxu0 0.0
        %2672 = vmatprep.subr.mxu0 0.0
        %2673 = vmatpush1.msra.mxu0 0.0
        %2674 = vmatprep.subr.mxu0 0.0
        %2675 = vmatpush1.msra.mxu0 0.0
        %2676 = vmatprep.subr.mxu0 0.0
        %2677 = vmatpush1.msra.mxu0 0.0
        %2678 = vmatprep.subr.mxu0 0.0
        %2679 = vmatpush1.msra.mxu0 0.0
        %2680 = vmatprep.subr.mxu0 0.0
        %2681 = vmatpush1.msra.mxu0 0.0
        %2682 = vmatprep.subr.mxu0 0.0
        %2683 = vmatpush1.msra.mxu0 0.0
        %2684 = vmatprep.subr.mxu0 0.0
        %2685 = vmatpush1.msra.mxu0 0.0
        %2686 = vmatprep.subr.mxu0 0.0
        %2687 = vmatpush1.msra.mxu0 0.0
        %2688 = vmatprep.subr.mxu0 0.0
        %2689 = vmatpush1.msra.mxu0 0.0
        %2690 = vmatprep.subr.mxu0 0.0
        %2691 = vmatpush1.msra.mxu0 0.0
        %2692 = vmatprep.subr.mxu0 0.0
        %2693 = vmatpush1.msra.mxu0 0.0
        %2694 = vmatprep.subr.mxu0 0.0
        %2695 = vmatpush1.msra.mxu0 0.0
        %2696 = vmatprep.subr.mxu0 0.0
        %2697 = vmatpush1.msra.mxu0 0.0
        %2698 = vmatprep.mubr.f32.mxu0 0.0
        %2699 = vmatmul.mubr.f32.gmra.mrb[0].mxu0 %v1283
        %v2700 = vpop.f32.mrb[0].mxu0
        %v2701 = vadd.f32 %v2630, %v2700
        %v2702 = vpop.f32.mrb[0].mxu0
        %v2703 = vadd.f32 %v2632, %v2702
        %2704 = vdwg.mxu0
        %vm2705 = vcmp.gt.f32.partialorder %v1565, 0.0
        %vm2706 = vcmp.gt.f32.partialorder %v1567, 0.0
        %vm2707 = vcmp.gt.f32.partialorder %v1849, 0.0
        %vm2708 = vcmp.gt.f32.partialorder %v1851, 0.0
        %vm2709 = vcmp.gt.f32.partialorder %v2133, 0.0
        %vm2710 = vcmp.gt.f32.partialorder %v2135, 0.0
        %vm2711 = vcmp.gt.f32.partialorder %v2417, 0.0
        %vm2712 = vcmp.gt.f32.partialorder %v2419, 0.0
        %vm2713 = vcmp.gt.f32.partialorder %v2701, 0.0
        %vm2714 = vcmp.gt.f32.partialorder %v2703, 0.0
        %v2715 = vmul.f32 %v1565, 0.01
        %v2716 = vmul.f32 %v1567, 0.01
        %v2717 = vmul.f32 %v1849, 0.01
        %v2718 = vmul.f32 %v1851, 0.01
        %v2719 = vmul.f32 %v2133, 0.01
        %v2720 = vmul.f32 %v2135, 0.01
        %v2721 = vmul.f32 %v2417, 0.01
        %v2722 = vmul.f32 %v2419, 0.01
        %v2723 = vmul.f32 %v2701, 0.01
        %v2724 = vmul.f32 %v2703, 0.01
        %v2725 = vsel %vm2705, %v1565, %v2715
        %v2726 = vsel %vm2706, %v1567, %v2716
        %v2727 = vsel %vm2707, %v1849, %v2717
        %v2728 = vsel %vm2708, %v1851, %v2718
        %v2729 = vsel %vm2709, %v2133, %v2719
        %v2730 = vsel %vm2710, %v2135, %v2720
        %v2731 = vsel %vm2711, %v2417, %v2721
        %v2732 = vsel %vm2712, %v2419, %v2722
        %v2733 = vsel %vm2713, %v2701, %v2723
        %v2734 = vsel %vm2714, %v2703, %v2724
        %2735 = vst [vmem:[%s236] sm:$0xff] %v2725
        %2736 = vst [vmem:[%s236 + $0x8] sm:$0xff] %v2726
        %2737 = vst [vmem:[%s236 + $0x10] sm:$0xff] %v2727
        %2738 = vst [vmem:[%s236 + $0x18] sm:$0xff] %v2728
        %2739 = vst [vmem:[%s236 + $0x20] sm:$0xff] %v2729
        %2740 = vst [vmem:[%s236 + $0x28] sm:$0xff] %v2730
        %2741 = vst [vmem:[%s236 + $0x30] sm:$0xff] %v2731
        %2742 = vst [vmem:[%s236 + $0x38] sm:$0xff] %v2732
        %2743 = vst [vmem:[%s236 + $0x40] sm:$0xff] %v2733
        %2744 = vst [vmem:[%s236 + $0x48] sm:$0xff] %v2734
        %s2745 = sand.u32 %s102, 1
        %s2746 = scalar_lea.sflag [#allocation4], %s2745
        %s2747 = sand.u32 %s102, 1
        %s2748 = smul.addr %s2747, 80
        %s2749 = scalar_lea.vmem [#allocation8], %s2748
        // Predicated region
        $region45: #{tpu_custom_call.1} parent=31 // pred_check
          %p2750 = pneg %p112
        $region46: #{tpu_custom_call.1} parent=31 // pred_check_branch
          %2752 = sbr.rel (%p2750) target = $region48
        $region47: #{tpu_custom_call.1} parent=31 // pred_region
          %s2753 = smul.u32 10, %s21
          %s2755 = ssub.s32 1280, 1280
          %2756 = vsyncadd %s2746, %s2755
          %s2757 = smul.addr %s2753, 128
          %s2758 = scalar_lea.hbm %s3, %s2757
          %s2760 = sshll.u32 %s2749, 4
          %s2761 = int_to_ptr.vmem [resolvable:$true] %s2760
          %2763 = dma.vmem_to_hbm [thread:$0]  %s2761, 1280, %s2758, %s2746
        $region48: #{tpu_custom_call.1} parent=31 // pred_fallthru
          _
      $region32: #{tpu_custom_call.1} parent=5 // pred_fallthru
        _
      %p2764 = scmp.le.s32.totalorder 2, %s16
      // Predicated region
      $region49: #{tpu_custom_call.1} parent=5 // pred_check
        %p2765 = pneg %p2764
      $region50: #{tpu_custom_call.1} parent=5 // pred_check_branch
        %2767 = sbr.rel (%p2765) target = $region52
      $region51: #{tpu_custom_call.1} parent=5 // pred_region
        %s2768 = ssub.s32 %s16, 2
        // Predicated region
        $region53: #{tpu_custom_call.1} parent=51 // pred_check
          %p2769 = pneg %p118
        $region54: #{tpu_custom_call.1} parent=51 // pred_check_branch
          %2771 = sbr.rel (%p2769) target = $region56
        $region55: #{tpu_custom_call.1} parent=51 // pred_region
          %s2772 = sand.u32 %s103, 1
          %s2773 = scalar_lea.sflag [#allocation4], %s2772
          %s2774 = sand.u32 %s103, 1
          %s2775 = smul.addr %s2774, 80
          %s2776 = scalar_lea.vmem [#allocation8], %s2775
          %2777 = dma.done %s2773, 1280
        $region56: #{tpu_custom_call.1} parent=51 // pred_fallthru
          _
      $region52: #{tpu_custom_call.1} parent=5 // pred_fallthru
        _
    $region6: #{tpu_custom_call.1} parent=1 // loop_footer
      %s20 = sadd.s32 1, %s16
    $region7: #{tpu_custom_call.1} parent=1 // loop_footer_branch
      %15 = sbr.rel target = $region3
    $region8: #{tpu_custom_call.1} parent=1 // loop_exit
      _
    %2778 = vsyncpa [#allocation3], 1
    %s2779 = scalar_lea.sflag [#allocation3], 1
    %2780 = vsyncpa %s2779, 1
    %2781 = vsyncpa [#allocation6], 1
    %s2782 = scalar_lea.sflag [#allocation6], 1
    %2783 = vsyncpa %s2782, 1
    %2784 = vsyncpa [#allocation4], 1
    %s2785 = scalar_lea.sflag [#allocation4], 1
    %2786 = vsyncpa %s2785, 1

</llo_original>
